<compile_context>
chip_gen: v6e
topology: v6e:2x2x1
jax: 0.10.0
libtpu: 0.0.40
codegen_flags: <defaults>
</compile_context>

<pallas_src>
import numpy as np
import jax
import jax.numpy as jnp
from jax.experimental import pallas as pl
from jax.experimental.pallas import tpu as pltpu

_VMEM = pl.BlockSpec(memory_space=pltpu.MemorySpace.VMEM)


def _ceil8(n):
    return -(-n // 8) * 8


# ----------------------------------------------------------------------------
# Kernel (whole model: all TemporalBlocks + 1x1 residual convs + linear head).
# ----------------------------------------------------------------------------
def _make_kernel(cfg, *, batch):
    """cfg holds static row offsets into the packed weight slab + shapes."""
    K, L, O = cfg["K"], cfg["L"], cfg["O"]
    BL = batch * L

    def kernel(x_ref, pack_ref, o_ref):
        h = x_ref[...]                                   # (C0, B*L) f32 slab

        # Hoisted causal masks: one (1, B*L) bool per distinct shift amount.
        t_pos = jax.lax.broadcasted_iota(jnp.int32, (1, BL), 1) % L
        shift_vals = sorted({(K - 1 - k) * blk["dilation"]
                             for blk in cfg["blocks"] for k in range(K)})
        kill = {s: t_pos < s for s in shift_vals if 0 < s < L}

        def shift_right(v, s):
            """Causal right-shift by s inside every length-L batch segment."""
            if s == 0:
                return v
            if s >= L:                                   # tap is entirely padding
                return jnp.zeros_like(v)
            moved = jnp.concatenate(
                [jnp.zeros((v.shape[0], s), jnp.float32), v[:, :BL - s]], axis=1)
            return jnp.where(kill[s], 0.0, moved)

        def conv(v, w_offs, b_off, cout, cin, dilation):
            """Causal dilated Conv1d: K small MXU matmuls accumulated in f32."""
            acc = None
            for k in range(K):
                w_k = pack_ref[w_offs[k]:w_offs[k] + cout, 0:cin]     # (cout, cin)
                part = jnp.dot(w_k, shift_right(v, (K - 1 - k) * dilation),
                               preferred_element_type=jnp.float32)
                acc = part if acc is None else acc + part
            return acc + pack_ref[b_off:b_off + cout, 0:1]            # + bias

        # TemporalBlocks (eval): relu(conv1) -> relu(conv2) -> relu(out + res).
        for blk in cfg["blocks"]:
            cin, cout, d = blk["cin"], blk["cout"], blk["dilation"]
            h1 = jnp.maximum(conv(h,  blk["w1"], blk["b1"], cout, cin,  d), 0.0)
            h2 = jnp.maximum(conv(h1, blk["w2"], blk["b2"], cout, cout, d), 0.0)
            if blk["wd"] is not None:                    # 1x1 downsample conv
                wd = pack_ref[blk["wd"]:blk["wd"] + cout, 0:cin]
                res = (jnp.dot(wd, h, preferred_element_type=jnp.float32)
                       + pack_ref[blk["bd"]:blk["bd"] + cout, 0:1])
            else:
                res = h
            h = jnp.maximum(h2 + res, 0.0)

        # Final channel count is 1 -> h is (1, B*L); segment b is row b of
        # PyTorch's y1.squeeze().  Linear head: (B, L) @ (L, O) + b, done as B
        # tiny matmuls on static lane windows (avoids a lane->sublane reshape).
        lw = pack_ref[cfg["lin_w"]:cfg["lin_w"] + L, 0:O]             # (L, O)
        lb = pack_ref[cfg["lin_b"]:cfg["lin_b"] + 1, 0:O]             # (1, O)
        rows = []
        for b in range(batch):
            h_b = h[:, b * L:(b + 1) * L]                             # (1, L)
            rows.append(jnp.dot(h_b, lw, preferred_element_type=jnp.float32) + lb)
        out = rows[0] if batch == 1 else jnp.concatenate(rows, axis=0)
        # NOTE: for batch==1 PyTorch's squeeze() yields a 1-D (O,) tensor; the
        # values are identical, only the leading singleton dim differs here.
        o_ref[...] = out.astype(o_ref.dtype)

    return kernel


# ----------------------------------------------------------------------------
# Wrapper: one-time layout plumbing + a single pallas_call.
# ----------------------------------------------------------------------------
def make_forward(cfg, batch, in_channels, out_dtype=jnp.float32):
    """Returns a jitted forward: (x:(B, C0, L), pack) -> (B, output_size)."""
    L, O = cfg["L"], cfg["O"]
    kernel = _make_kernel(cfg, batch=batch)

    @jax.jit
    def forward(x, pack):
        # Layout plumbing only: (B, C0, L) -> (C0, B*L), lane index = b*L + t.
        x_slab = (jnp.transpose(x, (1, 0, 2))
                  .reshape(in_channels, batch * L).astype(jnp.float32))
        return pl.pallas_call(
            kernel,
            out_shape=jax.ShapeDtypeStruct((batch, O), out_dtype),
            in_specs=[_VMEM, _VMEM],
            out_specs=_VMEM,
            compiler_params=pltpu.CompilerParams(
                vmem_limit_bytes=32 * 1024 * 1024),   # safe on v5e/v6e/v7x
        )(x_slab, pack)

    return forward


# ----------------------------------------------------------------------------
# Parameter init: TCN-repo style (conv weights ~ N(0, 0.01), biases 0,
# weight_norm folded).  Everything is packed ONCE into a single (rows, 128)
# f32 slab; cfg carries the static row offsets the kernel slices with.
# ----------------------------------------------------------------------------
def init_model(key, input_size, output_size, num_channels, kernel_size,
               sequence_length):
    assert num_channels[-1] == 1, \
        "final num_channels must be 1 (the module squeezes the channel dim)"
    K, L, O = kernel_size, sequence_length, output_size

    mats, offs = [], []

    def add(m):
        off = sum(_ceil8(x.shape[0]) for x in mats)
        offs.append(off)
        mats.append(np.asarray(m, np.float32))
        return off

    cfg = {"blocks": [], "K": K, "L": L, "O": O}
    keys = list(jax.random.split(key, 3 * len(num_channels) + 1))
    ki = 0
    cin = input_size
    for i, cout in enumerate(num_channels):
        blk = {"cin": cin, "cout": cout, "dilation": 2 ** i}
        w1 = 0.01 * jax.random.normal(keys[ki], (cout, cin, K), jnp.float32); ki += 1
        w2 = 0.01 * jax.random.normal(keys[ki], (cout, cout, K), jnp.float32); ki += 1
        blk["w1"] = [add(w1[:, :, k]) for k in range(K)]          # per-tap (cout, cin)
        blk["b1"] = add(np.zeros((cout, 1), np.float32))
        blk["w2"] = [add(w2[:, :, k]) for k in range(K)]
        blk["b2"] = add(np.zeros((cout, 1), np.float32))
        if cin != cout:
            wd = 0.01 * jax.random.normal(keys[ki], (cout, cin), jnp.float32); ki += 1
            blk["wd"] = add(wd)
            blk["bd"] = add(np.zeros((cout, 1), np.float32))
        else:
            blk["wd"] = None
            blk["bd"] = None
            ki += 1
        cfg["blocks"].append(blk)
        cin = cout

    # Linear head stored pre-transposed (L, O); bias (1, O).
    lin_wT = 0.1 * jax.random.normal(keys[ki], (L, O), jnp.float32)
    cfg["lin_w"] = add(lin_wT)
    cfg["lin_b"] = add(np.zeros((1, O), np.float32))

    total_rows = max(sum(_ceil8(m.shape[0]) for m in mats), 8)
    assert max(m.shape[1] for m in mats) <= 128, "operand wider than one lane tile"
    pack_np = np.zeros((total_rows, 128), np.float32)
    for off, m in zip(offs, mats):
        pack_np[off:off + m.shape[0], :m.shape[1]] = m
    return jnp.asarray(pack_np), cfg


if __name__ == "__main__":
    # Small shapes consistent with the module:
    #   input_size=4 channels, sequence_length=16, num_channels=[8, 8, 1],
    #   kernel_size=2, output_size=3, batch=2, dropout irrelevant (eval).
    B, input_size, seq_len = 2, 4, 16
    num_channels = [8, 8, 1]
    kernel_size = 2
    output_size = 3

    key = jax.random.PRNGKey(0)
    kx, kp = jax.random.split(key)
    x = jax.random.normal(kx, (B, input_size, seq_len), jnp.float32)

    pack, cfg = init_model(kp, input_size, output_size, num_channels,
                           kernel_size, seq_len)
    forward = make_forward(cfg, B, input_size)

    out = forward(x, pack)
    jax.block_until_ready(out)
    assert out.shape == (B, output_size), out.shape
    print("KERNEL_OK")
</pallas_src>

<mosaic_0001>
module attributes {stable_mosaic.version = 11 : i64} {
  func.func @kernel(%arg0: memref<4x32xf32, #tpu.memory_space<vmem>>, %arg1: memref<200x128xf32, #tpu.memory_space<vmem>>, %arg2: memref<2x3xf32, #tpu.memory_space<vmem>>) attributes {dimension_semantics = [], scalar_prefetch = 0 : i64, scratch_operands = 0 : i64, tpu.core_type = #tpu.core_type<tc>} {
    %c0 = arith.constant 0 : index
    %c0_0 = arith.constant 0 : index
    %0 = vector.load %arg0[%c0, %c0_0] : memref<4x32xf32, #tpu.memory_space<vmem>>, vector<4x32xf32>
    %1 = tpu.iota {dimensions = array<i32: 1>} : vector<1x32xi32>
    %c16_i32 = arith.constant 16 : i32
    %c0_i32 = arith.constant 0 : i32
    %2 = arith.cmpi eq, %c16_i32, %c0_i32 : i32
    %c1_i32 = arith.constant 1 : i32
    %3 = arith.select %2, %c1_i32, %c16_i32 : i32
    %4 = vector.broadcast %3 : i32 to vector<1x32xi32>
    %5 = arith.remsi %1, %4 : vector<1x32xi32>
    %c0_i32_1 = arith.constant 0 : i32
    %6 = vector.broadcast %c0_i32_1 : i32 to vector<1x32xi32>
    %7 = arith.cmpi ne, %5, %6 : vector<1x32xi32>
    %c0_i32_2 = arith.constant 0 : i32
    %8 = vector.broadcast %c0_i32_2 : i32 to vector<1x32xi32>
    %9 = arith.cmpi slt, %5, %8 : vector<1x32xi32>
    %c0_i32_3 = arith.constant 0 : i32
    %10 = arith.cmpi slt, %3, %c0_i32_3 : i32
    %11 = vector.broadcast %10 : i1 to vector<1x32xi1>
    %12 = vector.broadcast %11 : vector<1x32xi1> to vector<1x32xi1>
    %13 = arith.xori %9, %12 : vector<1x32xi1>
    %14 = arith.andi %13, %7 : vector<1x32xi1>
    %15 = vector.broadcast %3 : i32 to vector<1x32xi32>
    %16 = arith.addi %5, %15 : vector<1x32xi32>
    %17 = arith.select %14, %16, %5 : vector<1x32xi1>, vector<1x32xi32>
    %c1_i32_4 = arith.constant 1 : i32
    %18 = vector.broadcast %c1_i32_4 : i32 to vector<1x32xi32>
    %19 = arith.cmpi slt, %17, %18 : vector<1x32xi32>
    %c2_i32 = arith.constant 2 : i32
    %20 = vector.broadcast %c2_i32 : i32 to vector<1x32xi32>
    %21 = arith.cmpi slt, %17, %20 : vector<1x32xi32>
    %c4_i32 = arith.constant 4 : i32
    %22 = vector.broadcast %c4_i32 : i32 to vector<1x32xi32>
    %23 = arith.cmpi slt, %17, %22 : vector<1x32xi32>
    %c0_5 = arith.constant 0 : index
    %c0_6 = arith.constant 0 : index
    %24 = vector.load %arg1[%c0_5, %c0_6] : memref<200x128xf32, #tpu.memory_space<vmem>>, vector<8x4xf32>
    %cst = arith.constant 0.000000e+00 : f32
    %25 = vector.broadcast %cst : f32 to vector<4x1xf32>
    %26 = vector.extract_strided_slice %0 {offsets = [0, 0], sizes = [4, 31], strides = [1, 1]} : vector<4x32xf32> to vector<4x31xf32>
    %27 = tpu.concatenate %25, %26 in 1 : vector<4x1xf32>, vector<4x31xf32> -> vector<4x32xf32>
    %cst_7 = arith.constant 0.000000e+00 : f32
    %28 = vector.shape_cast %19 : vector<1x32xi1> to vector<1x32xi1>
    %29 = vector.broadcast %28 : vector<1x32xi1> to vector<4x32xi1>
    %30 = vector.broadcast %cst_7 : f32 to vector<4x32xf32>
    %31 = arith.select %29, %30, %27 : vector<4x32xi1>, vector<4x32xf32>
    %cst_8 = arith.constant dense<0.000000e+00> : vector<8x32xf32>
    %32 = tpu.matmul %24, %31, %cst_8 {dimension_numbers = #tpu.dot_dimension_numbers<[1], [0], [0], [1], [0, 0, 1, 1], [], []>} : vector<8x4xf32>, vector<4x32xf32>, vector<8x32xf32> -> vector<8x32xf32>
    %c8 = arith.constant 8 : index
    %c0_9 = arith.constant 0 : index
    %33 = vector.load %arg1[%c8, %c0_9] : memref<200x128xf32, #tpu.memory_space<vmem>>, vector<8x4xf32>
    %cst_10 = arith.constant dense<0.000000e+00> : vector<8x32xf32>
    %34 = tpu.matmul %33, %0, %cst_10 {dimension_numbers = #tpu.dot_dimension_numbers<[1], [0], [0], [1], [0, 0, 1, 1], [], []>} : vector<8x4xf32>, vector<4x32xf32>, vector<8x32xf32> -> vector<8x32xf32>
    %35 = arith.addf %32, %34 : vector<8x32xf32>
    %c16 = arith.constant 16 : index
    %c0_11 = arith.constant 0 : index
    %36 = vector.load %arg1[%c16, %c0_11] : memref<200x128xf32, #tpu.memory_space<vmem>>, vector<8x1xf32>
    %37 = vector.broadcast %36 : vector<8x1xf32> to vector<8x32xf32>
    %38 = arith.addf %35, %37 : vector<8x32xf32>
    %cst_12 = arith.constant 0.000000e+00 : f32
    %39 = vector.broadcast %cst_12 : f32 to vector<8x32xf32>
    %40 = arith.maximumf %38, %39 : vector<8x32xf32>
    %c24 = arith.constant 24 : index
    %c0_13 = arith.constant 0 : index
    %41 = vector.load %arg1[%c24, %c0_13] : memref<200x128xf32, #tpu.memory_space<vmem>>, vector<8x8xf32>
    %cst_14 = arith.constant 0.000000e+00 : f32
    %42 = vector.broadcast %cst_14 : f32 to vector<8x1xf32>
    %43 = vector.extract_strided_slice %40 {offsets = [0, 0], sizes = [8, 31], strides = [1, 1]} : vector<8x32xf32> to vector<8x31xf32>
    %44 = tpu.concatenate %42, %43 in 1 : vector<8x1xf32>, vector<8x31xf32> -> vector<8x32xf32>
    %cst_15 = arith.constant 0.000000e+00 : f32
    %45 = vector.shape_cast %19 : vector<1x32xi1> to vector<1x32xi1>
    %46 = vector.broadcast %45 : vector<1x32xi1> to vector<8x32xi1>
    %47 = vector.broadcast %cst_15 : f32 to vector<8x32xf32>
    %48 = arith.select %46, %47, %44 : vector<8x32xi1>, vector<8x32xf32>
    %cst_16 = arith.constant dense<0.000000e+00> : vector<8x32xf32>
    %49 = tpu.matmul %41, %48, %cst_16 {dimension_numbers = #tpu.dot_dimension_numbers<[1], [0], [0], [1], [0, 0, 1, 1], [], []>} : vector<8x8xf32>, vector<8x32xf32>, vector<8x32xf32> -> vector<8x32xf32>
    %c32 = arith.constant 32 : index
    %c0_17 = arith.constant 0 : index
    %50 = vector.load %arg1[%c32, %c0_17] : memref<200x128xf32, #tpu.memory_space<vmem>>, vector<8x8xf32>
    %cst_18 = arith.constant dense<0.000000e+00> : vector<8x32xf32>
    %51 = tpu.matmul %50, %40, %cst_18 {dimension_numbers = #tpu.dot_dimension_numbers<[1], [0], [0], [1], [0, 0, 1, 1], [], []>} : vector<8x8xf32>, vector<8x32xf32>, vector<8x32xf32> -> vector<8x32xf32>
    %52 = arith.addf %49, %51 : vector<8x32xf32>
    %c40 = arith.constant 40 : index
    %c0_19 = arith.constant 0 : index
    %53 = vector.load %arg1[%c40, %c0_19] : memref<200x128xf32, #tpu.memory_space<vmem>>, vector<8x1xf32>
    %54 = vector.broadcast %53 : vector<8x1xf32> to vector<8x32xf32>
    %55 = arith.addf %52, %54 : vector<8x32xf32>
    %cst_20 = arith.constant 0.000000e+00 : f32
    %56 = vector.broadcast %cst_20 : f32 to vector<8x32xf32>
    %57 = arith.maximumf %55, %56 : vector<8x32xf32>
    %c48 = arith.constant 48 : index
    %c0_21 = arith.constant 0 : index
    %58 = vector.load %arg1[%c48, %c0_21] : memref<200x128xf32, #tpu.memory_space<vmem>>, vector<8x4xf32>
    %cst_22 = arith.constant dense<0.000000e+00> : vector<8x32xf32>
    %59 = tpu.matmul %58, %0, %cst_22 {dimension_numbers = #tpu.dot_dimension_numbers<[1], [0], [0], [1], [0, 0, 1, 1], [], []>} : vector<8x4xf32>, vector<4x32xf32>, vector<8x32xf32> -> vector<8x32xf32>
    %c56 = arith.constant 56 : index
    %c0_23 = arith.constant 0 : index
    %60 = vector.load %arg1[%c56, %c0_23] : memref<200x128xf32, #tpu.memory_space<vmem>>, vector<8x1xf32>
    %61 = vector.broadcast %60 : vector<8x1xf32> to vector<8x32xf32>
    %62 = arith.addf %59, %61 : vector<8x32xf32>
    %63 = arith.addf %57, %62 : vector<8x32xf32>
    %cst_24 = arith.constant 0.000000e+00 : f32
    %64 = vector.broadcast %cst_24 : f32 to vector<8x32xf32>
    %65 = arith.maximumf %63, %64 : vector<8x32xf32>
    %c64 = arith.constant 64 : index
    %c0_25 = arith.constant 0 : index
    %66 = vector.load %arg1[%c64, %c0_25] : memref<200x128xf32, #tpu.memory_space<vmem>>, vector<8x8xf32>
    %cst_26 = arith.constant 0.000000e+00 : f32
    %67 = vector.broadcast %cst_26 : f32 to vector<8x2xf32>
    %68 = vector.extract_strided_slice %65 {offsets = [0, 0], sizes = [8, 30], strides = [1, 1]} : vector<8x32xf32> to vector<8x30xf32>
    %69 = tpu.concatenate %67, %68 in 1 : vector<8x2xf32>, vector<8x30xf32> -> vector<8x32xf32>
    %cst_27 = arith.constant 0.000000e+00 : f32
    %70 = vector.shape_cast %21 : vector<1x32xi1> to vector<1x32xi1>
    %71 = vector.broadcast %70 : vector<1x32xi1> to vector<8x32xi1>
    %72 = vector.broadcast %cst_27 : f32 to vector<8x32xf32>
    %73 = arith.select %71, %72, %69 : vector<8x32xi1>, vector<8x32xf32>
    %cst_28 = arith.constant dense<0.000000e+00> : vector<8x32xf32>
    %74 = tpu.matmul %66, %73, %cst_28 {dimension_numbers = #tpu.dot_dimension_numbers<[1], [0], [0], [1], [0, 0, 1, 1], [], []>} : vector<8x8xf32>, vector<8x32xf32>, vector<8x32xf32> -> vector<8x32xf32>
    %c72 = arith.constant 72 : index
    %c0_29 = arith.constant 0 : index
    %75 = vector.load %arg1[%c72, %c0_29] : memref<200x128xf32, #tpu.memory_space<vmem>>, vector<8x8xf32>
    %cst_30 = arith.constant dense<0.000000e+00> : vector<8x32xf32>
    %76 = tpu.matmul %75, %65, %cst_30 {dimension_numbers = #tpu.dot_dimension_numbers<[1], [0], [0], [1], [0, 0, 1, 1], [], []>} : vector<8x8xf32>, vector<8x32xf32>, vector<8x32xf32> -> vector<8x32xf32>
    %77 = arith.addf %74, %76 : vector<8x32xf32>
    %c80 = arith.constant 80 : index
    %c0_31 = arith.constant 0 : index
    %78 = vector.load %arg1[%c80, %c0_31] : memref<200x128xf32, #tpu.memory_space<vmem>>, vector<8x1xf32>
    %79 = vector.broadcast %78 : vector<8x1xf32> to vector<8x32xf32>
    %80 = arith.addf %77, %79 : vector<8x32xf32>
    %cst_32 = arith.constant 0.000000e+00 : f32
    %81 = vector.broadcast %cst_32 : f32 to vector<8x32xf32>
    %82 = arith.maximumf %80, %81 : vector<8x32xf32>
    %c88 = arith.constant 88 : index
    %c0_33 = arith.constant 0 : index
    %83 = vector.load %arg1[%c88, %c0_33] : memref<200x128xf32, #tpu.memory_space<vmem>>, vector<8x8xf32>
    %cst_34 = arith.constant 0.000000e+00 : f32
    %84 = vector.broadcast %cst_34 : f32 to vector<8x2xf32>
    %85 = vector.extract_strided_slice %82 {offsets = [0, 0], sizes = [8, 30], strides = [1, 1]} : vector<8x32xf32> to vector<8x30xf32>
    %86 = tpu.concatenate %84, %85 in 1 : vector<8x2xf32>, vector<8x30xf32> -> vector<8x32xf32>
    %cst_35 = arith.constant 0.000000e+00 : f32
    %87 = vector.shape_cast %21 : vector<1x32xi1> to vector<1x32xi1>
    %88 = vector.broadcast %87 : vector<1x32xi1> to vector<8x32xi1>
    %89 = vector.broadcast %cst_35 : f32 to vector<8x32xf32>
    %90 = arith.select %88, %89, %86 : vector<8x32xi1>, vector<8x32xf32>
    %cst_36 = arith.constant dense<0.000000e+00> : vector<8x32xf32>
    %91 = tpu.matmul %83, %90, %cst_36 {dimension_numbers = #tpu.dot_dimension_numbers<[1], [0], [0], [1], [0, 0, 1, 1], [], []>} : vector<8x8xf32>, vector<8x32xf32>, vector<8x32xf32> -> vector<8x32xf32>
    %c96 = arith.constant 96 : index
    %c0_37 = arith.constant 0 : index
    %92 = vector.load %arg1[%c96, %c0_37] : memref<200x128xf32, #tpu.memory_space<vmem>>, vector<8x8xf32>
    %cst_38 = arith.constant dense<0.000000e+00> : vector<8x32xf32>
    %93 = tpu.matmul %92, %82, %cst_38 {dimension_numbers = #tpu.dot_dimension_numbers<[1], [0], [0], [1], [0, 0, 1, 1], [], []>} : vector<8x8xf32>, vector<8x32xf32>, vector<8x32xf32> -> vector<8x32xf32>
    %94 = arith.addf %91, %93 : vector<8x32xf32>
    %c104 = arith.constant 104 : index
    %c0_39 = arith.constant 0 : index
    %95 = vector.load %arg1[%c104, %c0_39] : memref<200x128xf32, #tpu.memory_space<vmem>>, vector<8x1xf32>
    %96 = vector.broadcast %95 : vector<8x1xf32> to vector<8x32xf32>
    %97 = arith.addf %94, %96 : vector<8x32xf32>
    %cst_40 = arith.constant 0.000000e+00 : f32
    %98 = vector.broadcast %cst_40 : f32 to vector<8x32xf32>
    %99 = arith.maximumf %97, %98 : vector<8x32xf32>
    %100 = arith.addf %99, %65 : vector<8x32xf32>
    %cst_41 = arith.constant 0.000000e+00 : f32
    %101 = vector.broadcast %cst_41 : f32 to vector<8x32xf32>
    %102 = arith.maximumf %100, %101 : vector<8x32xf32>
    %c112 = arith.constant 112 : index
    %c0_42 = arith.constant 0 : index
    %103 = vector.load %arg1[%c112, %c0_42] : memref<200x128xf32, #tpu.memory_space<vmem>>, vector<1x8xf32>
    %cst_43 = arith.constant 0.000000e+00 : f32
    %104 = vector.broadcast %cst_43 : f32 to vector<8x4xf32>
    %105 = vector.extract_strided_slice %102 {offsets = [0, 0], sizes = [8, 28], strides = [1, 1]} : vector<8x32xf32> to vector<8x28xf32>
    %106 = tpu.concatenate %104, %105 in 1 : vector<8x4xf32>, vector<8x28xf32> -> vector<8x32xf32>
    %cst_44 = arith.constant 0.000000e+00 : f32
    %107 = vector.shape_cast %23 : vector<1x32xi1> to vector<1x32xi1>
    %108 = vector.broadcast %107 : vector<1x32xi1> to vector<8x32xi1>
    %109 = vector.broadcast %cst_44 : f32 to vector<8x32xf32>
    %110 = arith.select %108, %109, %106 : vector<8x32xi1>, vector<8x32xf32>
    %cst_45 = arith.constant dense<0.000000e+00> : vector<1x32xf32>
    %111 = tpu.matmul %103, %110, %cst_45 {dimension_numbers = #tpu.dot_dimension_numbers<[1], [0], [0], [1], [0, 0, 1, 1], [], []>} : vector<1x8xf32>, vector<8x32xf32>, vector<1x32xf32> -> vector<1x32xf32>
    %c120 = arith.constant 120 : index
    %c0_46 = arith.constant 0 : index
    %112 = vector.load %arg1[%c120, %c0_46] : memref<200x128xf32, #tpu.memory_space<vmem>>, vector<1x8xf32>
    %cst_47 = arith.constant dense<0.000000e+00> : vector<1x32xf32>
    %113 = tpu.matmul %112, %102, %cst_47 {dimension_numbers = #tpu.dot_dimension_numbers<[1], [0], [0], [1], [0, 0, 1, 1], [], []>} : vector<1x8xf32>, vector<8x32xf32>, vector<1x32xf32> -> vector<1x32xf32>
    %114 = arith.addf %111, %113 : vector<1x32xf32>
    %c128 = arith.constant 128 : index
    %c0_48 = arith.constant 0 : index
    %115 = vector.load %arg1[%c128, %c0_48] : memref<200x128xf32, #tpu.memory_space<vmem>>, vector<1x1xf32>
    %116 = vector.broadcast %115 : vector<1x1xf32> to vector<1x32xf32>
    %117 = arith.addf %114, %116 : vector<1x32xf32>
    %cst_49 = arith.constant 0.000000e+00 : f32
    %118 = vector.broadcast %cst_49 : f32 to vector<1x32xf32>
    %119 = arith.maximumf %117, %118 : vector<1x32xf32>
    %c136 = arith.constant 136 : index
    %c0_50 = arith.constant 0 : index
    %120 = vector.load %arg1[%c136, %c0_50] : memref<200x128xf32, #tpu.memory_space<vmem>>, vector<1x1xf32>
    %cst_51 = arith.constant 0.000000e+00 : f32
    %121 = vector.broadcast %cst_51 : f32 to vector<1x4xf32>
    %122 = vector.extract_strided_slice %119 {offsets = [0, 0], sizes = [1, 28], strides = [1, 1]} : vector<1x32xf32> to vector<1x28xf32>
    %123 = tpu.concatenate %121, %122 in 1 : vector<1x4xf32>, vector<1x28xf32> -> vector<1x32xf32>
    %cst_52 = arith.constant 0.000000e+00 : f32
    %124 = vector.broadcast %cst_52 : f32 to vector<1x32xf32>
    %125 = arith.select %23, %124, %123 : vector<1x32xi1>, vector<1x32xf32>
    %cst_53 = arith.constant dense<0.000000e+00> : vector<1x32xf32>
    %126 = tpu.matmul %120, %125, %cst_53 {dimension_numbers = #tpu.dot_dimension_numbers<[1], [0], [0], [1], [0, 0, 1, 1], [], []>} : vector<1x1xf32>, vector<1x32xf32>, vector<1x32xf32> -> vector<1x32xf32>
    %c144 = arith.constant 144 : index
    %c0_54 = arith.constant 0 : index
    %127 = vector.load %arg1[%c144, %c0_54] : memref<200x128xf32, #tpu.memory_space<vmem>>, vector<1x1xf32>
    %cst_55 = arith.constant dense<0.000000e+00> : vector<1x32xf32>
    %128 = tpu.matmul %127, %119, %cst_55 {dimension_numbers = #tpu.dot_dimension_numbers<[1], [0], [0], [1], [0, 0, 1, 1], [], []>} : vector<1x1xf32>, vector<1x32xf32>, vector<1x32xf32> -> vector<1x32xf32>
    %129 = arith.addf %126, %128 : vector<1x32xf32>
    %c152 = arith.constant 152 : index
    %c0_56 = arith.constant 0 : index
    %130 = vector.load %arg1[%c152, %c0_56] : memref<200x128xf32, #tpu.memory_space<vmem>>, vector<1x1xf32>
    %131 = vector.broadcast %130 : vector<1x1xf32> to vector<1x32xf32>
    %132 = arith.addf %129, %131 : vector<1x32xf32>
    %cst_57 = arith.constant 0.000000e+00 : f32
    %133 = vector.broadcast %cst_57 : f32 to vector<1x32xf32>
    %134 = arith.maximumf %132, %133 : vector<1x32xf32>
    %c160 = arith.constant 160 : index
    %c0_58 = arith.constant 0 : index
    %135 = vector.load %arg1[%c160, %c0_58] : memref<200x128xf32, #tpu.memory_space<vmem>>, vector<1x8xf32>
    %cst_59 = arith.constant dense<0.000000e+00> : vector<1x32xf32>
    %136 = tpu.matmul %135, %102, %cst_59 {dimension_numbers = #tpu.dot_dimension_numbers<[1], [0], [0], [1], [0, 0, 1, 1], [], []>} : vector<1x8xf32>, vector<8x32xf32>, vector<1x32xf32> -> vector<1x32xf32>
    %c168 = arith.constant 168 : index
    %c0_60 = arith.constant 0 : index
    %137 = vector.load %arg1[%c168, %c0_60] : memref<200x128xf32, #tpu.memory_space<vmem>>, vector<1x1xf32>
    %138 = vector.broadcast %137 : vector<1x1xf32> to vector<1x32xf32>
    %139 = arith.addf %136, %138 : vector<1x32xf32>
    %140 = arith.addf %134, %139 : vector<1x32xf32>
    %cst_61 = arith.constant 0.000000e+00 : f32
    %141 = vector.broadcast %cst_61 : f32 to vector<1x32xf32>
    %142 = arith.maximumf %140, %141 : vector<1x32xf32>
    %c176 = arith.constant 176 : index
    %c0_62 = arith.constant 0 : index
    %143 = vector.load %arg1[%c176, %c0_62] : memref<200x128xf32, #tpu.memory_space<vmem>>, vector<16x3xf32>
    %c192 = arith.constant 192 : index
    %c0_63 = arith.constant 0 : index
    %144 = vector.load %arg1[%c192, %c0_63] : memref<200x128xf32, #tpu.memory_space<vmem>>, vector<1x3xf32>
    %145 = vector.extract_strided_slice %142 {offsets = [0, 0], sizes = [1, 16], strides = [1, 1]} : vector<1x32xf32> to vector<1x16xf32>
    %cst_64 = arith.constant dense<0.000000e+00> : vector<1x3xf32>
    %146 = tpu.matmul %145, %143, %cst_64 {dimension_numbers = #tpu.dot_dimension_numbers<[1], [0], [0], [1], [0, 0, 1, 1], [], []>} : vector<1x16xf32>, vector<16x3xf32>, vector<1x3xf32> -> vector<1x3xf32>
    %147 = arith.addf %146, %144 : vector<1x3xf32>
    %148 = vector.extract_strided_slice %142 {offsets = [0, 16], sizes = [1, 16], strides = [1, 1]} : vector<1x32xf32> to vector<1x16xf32>
    %cst_65 = arith.constant dense<0.000000e+00> : vector<1x3xf32>
    %149 = tpu.matmul %148, %143, %cst_65 {dimension_numbers = #tpu.dot_dimension_numbers<[1], [0], [0], [1], [0, 0, 1, 1], [], []>} : vector<1x16xf32>, vector<16x3xf32>, vector<1x3xf32> -> vector<1x3xf32>
    %150 = arith.addf %149, %144 : vector<1x3xf32>
    %151 = tpu.concatenate %147, %150 in 0 : vector<1x3xf32>, vector<1x3xf32> -> vector<2x3xf32>
    %c0_66 = arith.constant 0 : index
    %c0_67 = arith.constant 0 : index
    %152 = vector.load %arg2[%c0_66, %c0_67] : memref<2x3xf32, #tpu.memory_space<vmem>>, vector<2x3xf32>
    tpu.vector_store %arg2[%c0_66, %c0_67], %151 {strides = array<i32>} : memref<2x3xf32, #tpu.memory_space<vmem>>, vector<2x3xf32>,
    return
  }
}

</mosaic_0001>

<llo_original>
// kernel: forward.1
$region0: #{forward.1}
  #allocation0 [shape = 'u32[]', space=smem, size = 0x4, offset = 0x4, fixed_abs, tag = 'smem constant byte address 0x4 - core index']
  #allocation1 [shape = 'u32[144,128]{1,0:T(1,128)}', space=vmem, size = 0x12000, scoped, tag = 'internal scratch']
  %s0 = inlined_call_operand.vmem [shape: f32[4,32], index: 0, kind: input, shape index: {}]
  %s1 = inlined_call_operand.hbm [shape: f32[200,128], index: 1, kind: input, shape index: {}]
  %s2 = inlined_call_operand.hbm [shape: f32[2,3], index: 2, kind: output, shape index: {}]
  %s3 = sld [smem:[#allocation0]]
  $region22: #{forward.1} parent=0
    _
  %s5 = ssub.s32 1, %s3
  %s6 = scalar_select 0, %s5, %s3
  $region1: #{forward.1} parent=0
    #allocation2 [shape = 'u8[102400]{0}', space=vmem, size = 0x19000, scoped, tag = 'input window, operand 1, single buffered']
    #allocation3 [shape = 's32[1]{0}', space=sflag, size = 0x4, scoped, tag = 'scoped memory for forward.1']
    #allocation4 [shape = 's32[1]{0}', space=sflag, size = 0x4, scoped, tag = 'scoped memory for forward.1']
    #allocation5 [shape = 'u8[1024]{0}', space=vmem, size = 0x400, scoped, tag = 'output window, operand 0, single buffered']
    %7 = vsyncpa [#allocation3], 0
    %8 = vsyncpa [#allocation4], 0
    // Predicated region
    $region2: #{forward.1} parent=1 // pred_check
      _
    $region3: #{forward.1} parent=1 // pred_check_branch
      %10 = sbr.rel (0) target = $region5
    $region4: #{forward.1} parent=1 // pred_region
      _
    $region5: #{forward.1} parent=1 // pred_fallthru
      _
    // Predicated region
    $region6: #{forward.1} parent=1 // pred_check
      _
    $region7: #{forward.1} parent=1 // pred_check_branch
      %12 = sbr.rel (0) target = $region9
    $region8: #{forward.1} parent=1 // pred_region
      %s14 = ssub.s32 3200, 3200
      %15 = vsyncadd [#allocation3], %s14
      %s16 = sshll.u32 [#allocation2], 4
      %s17 = int_to_ptr.vmem [resolvable:$true] %s16
      %22 = dma.hbm_to_vmem [thread:$0]  %s1, 3200, %s17, [#allocation3], 128, 128, 8
    $region9: #{forward.1} parent=1 // pred_fallthru
      _
    // Predicated region
    $region10: #{forward.1} parent=1 // pred_check
      _
    $region11: #{forward.1} parent=1 // pred_check_branch
      %24 = sbr.rel (0) target = $region13
    $region12: #{forward.1} parent=1 // pred_region
      %25 = dma.done [#allocation3], 3200
    $region13: #{forward.1} parent=1 // pred_fallthru
      _
    %v26 = vld [vmem:[%s0] sm:$0xf]
    %v27 = vlaneseq
    %v28 = vand.u32 %v27, 127
    %vm29 = vcmp.lt.s32.totalorder %v28, 0
    %v30 = vsub.s32 0, %v28
    %v31 = vsel %vm29, %v30, %v28
    %v32 = vshrl.u32 %v31, 4
    %v33 = vand.u32 %v31, 15
    %v34 = vsub.s32 0, %v33
    %v35 = vsel %vm29, %v34, %v33
    %vm36 = vcmp.ne.s32.totalorder %v35, 0
    %vm37 = vcmp.lt.s32.totalorder %v35, 0
    %vm38 = vmand %vm37, %vm36
    %v39 = vadd.s32 %v35, 16
    %v40 = vsel %vm38, %v39, %v35
    %vm41 = vcmp.lt.s32.totalorder %v40, 1
    %vm42 = vcmp.lt.s32.totalorder %v40, 2
    %vm43 = vcmp.lt.s32.totalorder %v40, 4
    %v44 = vld [vmem:[#allocation2] sm:$0xff]
    %46 = vrot.lane.b32.xlu0 %v26, 1
    %v47 = vpop.permute.xlu0 %46
    %vm49 = vcmask 7168
    %v50 = vsel %vm49, 0.0, %v47
    %v51 = vsel %vm41, 1, 0
    %vm52 = vcmp.eq.s32.totalorder %v51, 1
    %v53 = vsel %vm52, 0.0, %v50
    %v54 = vld [vmem:[#allocation2 + $0x8] sm:$0xff]
    %vm55 = vcmask 31744
    %v57 = vsel %vm55, %v54, 0
    %vm59 = vcmask 1043456
    %v60 = vsel %vm59, %v26, 0
    %62 = vmatprep.subr.mxu0 0.0
    %63 = vmatpush1.msra.mxu0 0.0
    %64 = vmatprep.subr.mxu0 0.0
    %65 = vmatpush1.msra.mxu0 0.0
    %66 = vmatprep.subr.mxu0 0.0
    %67 = vmatpush1.msra.mxu0 0.0
    %68 = vmatprep.subr.mxu0 0.0
    %69 = vmatpush1.msra.mxu0 0.0
    %70 = vmatprep.subr.mxu0 0.0
    %71 = vmatpush1.msra.mxu0 0.0
    %72 = vmatprep.subr.mxu0 0.0
    %73 = vmatpush1.msra.mxu0 0.0
    %74 = vmatprep.subr.mxu0 0.0
    %75 = vmatpush1.msra.mxu0 0.0
    %76 = vmatprep.subr.mxu0 0.0
    %77 = vmatpush1.msra.mxu0 0.0
    %78 = vmatprep.subr.mxu0 0.0
    %79 = vmatpush1.msra.mxu0 0.0
    %80 = vmatprep.subr.mxu0 0.0
    %81 = vmatpush1.msra.mxu0 0.0
    %82 = vmatprep.subr.mxu0 0.0
    %83 = vmatpush1.msra.mxu0 0.0
    %84 = vmatprep.subr.mxu0 0.0
    %85 = vmatpush1.msra.mxu0 0.0
    %86 = vmatprep.subr.mxu0 0.0
    %87 = vmatpush1.msra.mxu0 0.0
    %88 = vmatprep.subr.mxu0 0.0
    %89 = vmatpush1.msra.mxu0 0.0
    %90 = vmatprep.subr.mxu0 0.0
    %91 = vmatpush1.msra.mxu0 0.0
    %92 = vmatprep.subr.mxu0 0.0
    %93 = vmatpush1.msra.mxu0 %v60
    %94 = vmatprep.subr.mxu0 0.0
    %95 = vmatpush2.msra.mxu0 0.0
    %96 = vmatprep.subr.mxu0 0.0
    %97 = vmatpush2.msra.mxu0 0.0
    %98 = vmatprep.subr.mxu0 0.0
    %99 = vmatpush2.msra.mxu0 0.0
    %100 = vmatprep.subr.mxu0 0.0
    %101 = vmatpush2.msra.mxu0 0.0
    %102 = vmatprep.subr.mxu0 0.0
    %103 = vmatpush2.msra.mxu0 0.0
    %104 = vmatprep.subr.mxu0 0.0
    %105 = vmatpush2.msra.mxu0 0.0
    %106 = vmatprep.subr.mxu0 0.0
    %107 = vmatpush2.msra.mxu0 0.0
    %108 = vmatprep.subr.mxu0 0.0
    %109 = vmatpush2.msra.mxu0 0.0
    %110 = vmatprep.subr.mxu0 0.0
    %111 = vmatpush2.msra.mxu0 0.0
    %112 = vmatprep.subr.mxu0 0.0
    %113 = vmatpush2.msra.mxu0 0.0
    %114 = vmatprep.subr.mxu0 0.0
    %115 = vmatpush2.msra.mxu0 0.0
    %116 = vmatprep.subr.mxu0 0.0
    %117 = vmatpush2.msra.mxu0 0.0
    %118 = vmatprep.subr.mxu0 0.0
    %119 = vmatpush2.msra.mxu0 0.0
    %120 = vmatprep.subr.mxu0 0.0
    %121 = vmatpush2.msra.mxu0 0.0
    %122 = vmatprep.subr.mxu0 0.0
    %123 = vmatpush2.msra.mxu0 0.0
    %124 = vmatprep.subr.mxu0 0.0
    %125 = vmatpush2.msra.mxu0 0.0
    %126 = vmatprep.mubr.f32.mxu0 0.0
    %127 = vmatmul.mubr.f32.gmra.mxu0 %v57
    %v128 = vpop.f32.mrf.mxu0
    %v129 = vadd.f32 0.0, %v128
    %v130 = vpop.f32.mrf.mxu0
    %131 = vdwg.mxu0
    %v133 = vsel %vm55, %v44, 0
    %v136 = vsel %vm59, %v53, 0
    %138 = vmatprep.subr.mxu0 0.0
    %139 = vmatpush1.msra.mxu0 0.0
    %140 = vmatprep.subr.mxu0 0.0
    %141 = vmatpush1.msra.mxu0 0.0
    %142 = vmatprep.subr.mxu0 0.0
    %143 = vmatpush1.msra.mxu0 0.0
    %144 = vmatprep.subr.mxu0 0.0
    %145 = vmatpush1.msra.mxu0 0.0
    %146 = vmatprep.subr.mxu0 0.0
    %147 = vmatpush1.msra.mxu0 0.0
    %148 = vmatprep.subr.mxu0 0.0
    %149 = vmatpush1.msra.mxu0 0.0
    %150 = vmatprep.subr.mxu0 0.0
    %151 = vmatpush1.msra.mxu0 0.0
    %152 = vmatprep.subr.mxu0 0.0
    %153 = vmatpush1.msra.mxu0 0.0
    %154 = vmatprep.subr.mxu0 0.0
    %155 = vmatpush1.msra.mxu0 0.0
    %156 = vmatprep.subr.mxu0 0.0
    %157 = vmatpush1.msra.mxu0 0.0
    %158 = vmatprep.subr.mxu0 0.0
    %159 = vmatpush1.msra.mxu0 0.0
    %160 = vmatprep.subr.mxu0 0.0
    %161 = vmatpush1.msra.mxu0 0.0
    %162 = vmatprep.subr.mxu0 0.0
    %163 = vmatpush1.msra.mxu0 0.0
    %164 = vmatprep.subr.mxu0 0.0
    %165 = vmatpush1.msra.mxu0 0.0
    %166 = vmatprep.subr.mxu0 0.0
    %167 = vmatpush1.msra.mxu0 0.0
    %168 = vmatprep.subr.mxu0 0.0
    %169 = vmatpush1.msra.mxu0 %v136
    %170 = vmatprep.subr.mxu0 0.0
    %171 = vmatpush2.msra.mxu0 0.0
    %172 = vmatprep.subr.mxu0 0.0
    %173 = vmatpush2.msra.mxu0 0.0
    %174 = vmatprep.subr.mxu0 0.0
    %175 = vmatpush2.msra.mxu0 0.0
    %176 = vmatprep.subr.mxu0 0.0
    %177 = vmatpush2.msra.mxu0 0.0
    %178 = vmatprep.subr.mxu0 0.0
    %179 = vmatpush2.msra.mxu0 0.0
    %180 = vmatprep.subr.mxu0 0.0
    %181 = vmatpush2.msra.mxu0 0.0
    %182 = vmatprep.subr.mxu0 0.0
    %183 = vmatpush2.msra.mxu0 0.0
    %184 = vmatprep.subr.mxu0 0.0
    %185 = vmatpush2.msra.mxu0 0.0
    %186 = vmatprep.subr.mxu0 0.0
    %187 = vmatpush2.msra.mxu0 0.0
    %188 = vmatprep.subr.mxu0 0.0
    %189 = vmatpush2.msra.mxu0 0.0
    %190 = vmatprep.subr.mxu0 0.0
    %191 = vmatpush2.msra.mxu0 0.0
    %192 = vmatprep.subr.mxu0 0.0
    %193 = vmatpush2.msra.mxu0 0.0
    %194 = vmatprep.subr.mxu0 0.0
    %195 = vmatpush2.msra.mxu0 0.0
    %196 = vmatprep.subr.mxu0 0.0
    %197 = vmatpush2.msra.mxu0 0.0
    %198 = vmatprep.subr.mxu0 0.0
    %199 = vmatpush2.msra.mxu0 0.0
    %200 = vmatprep.subr.mxu0 0.0
    %201 = vmatpush2.msra.mxu0 0.0
    %202 = vmatprep.mubr.f32.mxu0 0.0
    %203 = vmatmul.mubr.f32.gmra.mxu0 %v133
    %v204 = vpop.f32.mrf.mxu0
    %v205 = vadd.f32 %v129, %v204
    %v206 = vpop.f32.mrf.mxu0
    %207 = vdwg.mxu0
    %v208 = vld [vmem:[#allocation2 + $0x10] sm:$0xff]
    %210 = vset.pattern.permute.xlu0 0
    %211 = vperm.xlu0 %210, %v208
    %v212 = vpop.permute.xlu0 %211
    %v214 = vadd.f32 %v205, %v212
    %v215 = vmax.f32 %v214, 0.0
    %v216 = vld [vmem:[#allocation2 + $0x18] sm:$0xff]
    %218 = vrot.lane.b32.xlu0 %v215, 1
    %v219 = vpop.permute.xlu0 %218
    %v221 = vsel %vm49, 0.0, %v219
    %v222 = vsel %vm52, 0.0, %v221
    %v223 = vld [vmem:[#allocation2 + $0x20] sm:$0xff]
    %vm224 = vcmask 64512
    %v226 = vsel %vm224, %v223, 0
    %228 = vmatprep.subr.mxu0 0.0
    %229 = vmatpush1.msra.mxu0 0.0
    %230 = vmatprep.subr.mxu0 0.0
    %231 = vmatpush1.msra.mxu0 0.0
    %232 = vmatprep.subr.mxu0 0.0
    %233 = vmatpush1.msra.mxu0 0.0
    %234 = vmatprep.subr.mxu0 0.0
    %235 = vmatpush1.msra.mxu0 0.0
    %236 = vmatprep.subr.mxu0 0.0
    %237 = vmatpush1.msra.mxu0 0.0
    %238 = vmatprep.subr.mxu0 0.0
    %239 = vmatpush1.msra.mxu0 0.0
    %240 = vmatprep.subr.mxu0 0.0
    %241 = vmatpush1.msra.mxu0 0.0
    %242 = vmatprep.subr.mxu0 0.0
    %243 = vmatpush1.msra.mxu0 0.0
    %244 = vmatprep.subr.mxu0 0.0
    %245 = vmatpush1.msra.mxu0 0.0
    %246 = vmatprep.subr.mxu0 0.0
    %247 = vmatpush1.msra.mxu0 0.0
    %248 = vmatprep.subr.mxu0 0.0
    %249 = vmatpush1.msra.mxu0 0.0
    %250 = vmatprep.subr.mxu0 0.0
    %251 = vmatpush1.msra.mxu0 0.0
    %252 = vmatprep.subr.mxu0 0.0
    %253 = vmatpush1.msra.mxu0 0.0
    %254 = vmatprep.subr.mxu0 0.0
    %255 = vmatpush1.msra.mxu0 0.0
    %256 = vmatprep.subr.mxu0 0.0
    %257 = vmatpush1.msra.mxu0 0.0
    %258 = vmatprep.subr.mxu0 0.0
    %259 = vmatpush1.msra.mxu0 %v215
    %260 = vmatprep.subr.mxu0 0.0
    %261 = vmatpush2.msra.mxu0 0.0
    %262 = vmatprep.subr.mxu0 0.0
    %263 = vmatpush2.msra.mxu0 0.0
    %264 = vmatprep.subr.mxu0 0.0
    %265 = vmatpush2.msra.mxu0 0.0
    %266 = vmatprep.subr.mxu0 0.0
    %267 = vmatpush2.msra.mxu0 0.0
    %268 = vmatprep.subr.mxu0 0.0
    %269 = vmatpush2.msra.mxu0 0.0
    %270 = vmatprep.subr.mxu0 0.0
    %271 = vmatpush2.msra.mxu0 0.0
    %272 = vmatprep.subr.mxu0 0.0
    %273 = vmatpush2.msra.mxu0 0.0
    %274 = vmatprep.subr.mxu0 0.0
    %275 = vmatpush2.msra.mxu0 0.0
    %276 = vmatprep.subr.mxu0 0.0
    %277 = vmatpush2.msra.mxu0 0.0
    %278 = vmatprep.subr.mxu0 0.0
    %279 = vmatpush2.msra.mxu0 0.0
    %280 = vmatprep.subr.mxu0 0.0
    %281 = vmatpush2.msra.mxu0 0.0
    %282 = vmatprep.subr.mxu0 0.0
    %283 = vmatpush2.msra.mxu0 0.0
    %284 = vmatprep.subr.mxu0 0.0
    %285 = vmatpush2.msra.mxu0 0.0
    %286 = vmatprep.subr.mxu0 0.0
    %287 = vmatpush2.msra.mxu0 0.0
    %288 = vmatprep.subr.mxu0 0.0
    %289 = vmatpush2.msra.mxu0 0.0
    %290 = vmatprep.subr.mxu0 0.0
    %291 = vmatpush2.msra.mxu0 0.0
    %292 = vmatprep.mubr.f32.mxu0 0.0
    %293 = vmatmul.mubr.f32.gmra.mxu0 %v226
    %v294 = vpop.f32.mrf.mxu0
    %v295 = vadd.f32 0.0, %v294
    %v296 = vpop.f32.mrf.mxu0
    %297 = vdwg.mxu0
    %v299 = vsel %vm224, %v216, 0
    %301 = vmatprep.subr.mxu0 0.0
    %302 = vmatpush1.msra.mxu0 0.0
    %303 = vmatprep.subr.mxu0 0.0
    %304 = vmatpush1.msra.mxu0 0.0
    %305 = vmatprep.subr.mxu0 0.0
    %306 = vmatpush1.msra.mxu0 0.0
    %307 = vmatprep.subr.mxu0 0.0
    %308 = vmatpush1.msra.mxu0 0.0
    %309 = vmatprep.subr.mxu0 0.0
    %310 = vmatpush1.msra.mxu0 0.0
    %311 = vmatprep.subr.mxu0 0.0
    %312 = vmatpush1.msra.mxu0 0.0
    %313 = vmatprep.subr.mxu0 0.0
    %314 = vmatpush1.msra.mxu0 0.0
    %315 = vmatprep.subr.mxu0 0.0
    %316 = vmatpush1.msra.mxu0 0.0
    %317 = vmatprep.subr.mxu0 0.0
    %318 = vmatpush1.msra.mxu0 0.0
    %319 = vmatprep.subr.mxu0 0.0
    %320 = vmatpush1.msra.mxu0 0.0
    %321 = vmatprep.subr.mxu0 0.0
    %322 = vmatpush1.msra.mxu0 0.0
    %323 = vmatprep.subr.mxu0 0.0
    %324 = vmatpush1.msra.mxu0 0.0
    %325 = vmatprep.subr.mxu0 0.0
    %326 = vmatpush1.msra.mxu0 0.0
    %327 = vmatprep.subr.mxu0 0.0
    %328 = vmatpush1.msra.mxu0 0.0
    %329 = vmatprep.subr.mxu0 0.0
    %330 = vmatpush1.msra.mxu0 0.0
    %331 = vmatprep.subr.mxu0 0.0
    %332 = vmatpush1.msra.mxu0 %v222
    %333 = vmatprep.subr.mxu0 0.0
    %334 = vmatpush2.msra.mxu0 0.0
    %335 = vmatprep.subr.mxu0 0.0
    %336 = vmatpush2.msra.mxu0 0.0
    %337 = vmatprep.subr.mxu0 0.0
    %338 = vmatpush2.msra.mxu0 0.0
    %339 = vmatprep.subr.mxu0 0.0
    %340 = vmatpush2.msra.mxu0 0.0
    %341 = vmatprep.subr.mxu0 0.0
    %342 = vmatpush2.msra.mxu0 0.0
    %343 = vmatprep.subr.mxu0 0.0
    %344 = vmatpush2.msra.mxu0 0.0
    %345 = vmatprep.subr.mxu0 0.0
    %346 = vmatpush2.msra.mxu0 0.0
    %347 = vmatprep.subr.mxu0 0.0
    %348 = vmatpush2.msra.mxu0 0.0
    %349 = vmatprep.subr.mxu0 0.0
    %350 = vmatpush2.msra.mxu0 0.0
    %351 = vmatprep.subr.mxu0 0.0
    %352 = vmatpush2.msra.mxu0 0.0
    %353 = vmatprep.subr.mxu0 0.0
    %354 = vmatpush2.msra.mxu0 0.0
    %355 = vmatprep.subr.mxu0 0.0
    %356 = vmatpush2.msra.mxu0 0.0
    %357 = vmatprep.subr.mxu0 0.0
    %358 = vmatpush2.msra.mxu0 0.0
    %359 = vmatprep.subr.mxu0 0.0
    %360 = vmatpush2.msra.mxu0 0.0
    %361 = vmatprep.subr.mxu0 0.0
    %362 = vmatpush2.msra.mxu0 0.0
    %363 = vmatprep.subr.mxu0 0.0
    %364 = vmatpush2.msra.mxu0 0.0
    %365 = vmatprep.mubr.f32.mxu0 0.0
    %366 = vmatmul.mubr.f32.gmra.mxu0 %v299
    %v367 = vpop.f32.mrf.mxu0
    %v368 = vadd.f32 %v295, %v367
    %v369 = vpop.f32.mrf.mxu0
    %370 = vdwg.mxu0
    %v371 = vld [vmem:[#allocation2 + $0x28] sm:$0xff]
    %373 = vset.pattern.permute.xlu0 0
    %374 = vperm.xlu0 %373, %v371
    %v375 = vpop.permute.xlu0 %374
    %v377 = vadd.f32 %v368, %v375
    %v378 = vmax.f32 %v377, 0.0
    %v379 = vld [vmem:[#allocation2 + $0x30] sm:$0xff]
    %v380 = vld [vmem:[#allocation2 + $0x38] sm:$0xff]
    %382 = vset.pattern.permute.xlu0 0
    %383 = vperm.xlu0 %382, %v380
    %v384 = vpop.permute.xlu0 %383
    %v387 = vsel %vm55, %v379, 0
    %389 = vmatprep.subr.mxu0 0.0
    %390 = vmatpush1.msra.mxu0 0.0
    %391 = vmatprep.subr.mxu0 0.0
    %392 = vmatpush1.msra.mxu0 0.0
    %393 = vmatprep.subr.mxu0 0.0
    %394 = vmatpush1.msra.mxu0 0.0
    %395 = vmatprep.subr.mxu0 0.0
    %396 = vmatpush1.msra.mxu0 0.0
    %397 = vmatprep.subr.mxu0 0.0
    %398 = vmatpush1.msra.mxu0 0.0
    %399 = vmatprep.subr.mxu0 0.0
    %400 = vmatpush1.msra.mxu0 0.0
    %401 = vmatprep.subr.mxu0 0.0
    %402 = vmatpush1.msra.mxu0 0.0
    %403 = vmatprep.subr.mxu0 0.0
    %404 = vmatpush1.msra.mxu0 0.0
    %405 = vmatprep.subr.mxu0 0.0
    %406 = vmatpush1.msra.mxu0 0.0
    %407 = vmatprep.subr.mxu0 0.0
    %408 = vmatpush1.msra.mxu0 0.0
    %409 = vmatprep.subr.mxu0 0.0
    %410 = vmatpush1.msra.mxu0 0.0
    %411 = vmatprep.subr.mxu0 0.0
    %412 = vmatpush1.msra.mxu0 0.0
    %413 = vmatprep.subr.mxu0 0.0
    %414 = vmatpush1.msra.mxu0 0.0
    %415 = vmatprep.subr.mxu0 0.0
    %416 = vmatpush1.msra.mxu0 0.0
    %417 = vmatprep.subr.mxu0 0.0
    %418 = vmatpush1.msra.mxu0 0.0
    %419 = vmatprep.subr.mxu0 0.0
    %420 = vmatpush1.msra.mxu0 %v60
    %421 = vmatprep.subr.mxu0 0.0
    %422 = vmatpush2.msra.mxu0 0.0
    %423 = vmatprep.subr.mxu0 0.0
    %424 = vmatpush2.msra.mxu0 0.0
    %425 = vmatprep.subr.mxu0 0.0
    %426 = vmatpush2.msra.mxu0 0.0
    %427 = vmatprep.subr.mxu0 0.0
    %428 = vmatpush2.msra.mxu0 0.0
    %429 = vmatprep.subr.mxu0 0.0
    %430 = vmatpush2.msra.mxu0 0.0
    %431 = vmatprep.subr.mxu0 0.0
    %432 = vmatpush2.msra.mxu0 0.0
    %433 = vmatprep.subr.mxu0 0.0
    %434 = vmatpush2.msra.mxu0 0.0
    %435 = vmatprep.subr.mxu0 0.0
    %436 = vmatpush2.msra.mxu0 0.0
    %437 = vmatprep.subr.mxu0 0.0
    %438 = vmatpush2.msra.mxu0 0.0
    %439 = vmatprep.subr.mxu0 0.0
    %440 = vmatpush2.msra.mxu0 0.0
    %441 = vmatprep.subr.mxu0 0.0
    %442 = vmatpush2.msra.mxu0 0.0
    %443 = vmatprep.subr.mxu0 0.0
    %444 = vmatpush2.msra.mxu0 0.0
    %445 = vmatprep.subr.mxu0 0.0
    %446 = vmatpush2.msra.mxu0 0.0
    %447 = vmatprep.subr.mxu0 0.0
    %448 = vmatpush2.msra.mxu0 0.0
    %449 = vmatprep.subr.mxu0 0.0
    %450 = vmatpush2.msra.mxu0 0.0
    %451 = vmatprep.subr.mxu0 0.0
    %452 = vmatpush2.msra.mxu0 0.0
    %453 = vmatprep.mubr.f32.mxu0 0.0
    %454 = vmatmul.mubr.f32.gmra.mxu0 %v387
    %v455 = vpop.f32.mrf.mxu0
    %v456 = vadd.f32 %v384, %v455
    %v457 = vpop.f32.mrf.mxu0
    %458 = vdwg.mxu0
    %v459 = vadd.f32 %v378, %v456
    %v460 = vmax.f32 %v459, 0.0
    %v461 = vld [vmem:[#allocation2 + $0x40] sm:$0xff]
    %463 = vrot.lane.b32.xlu0 %v460, 2
    %v464 = vpop.permute.xlu0 %463
    %vm466 = vcmask 15360
    %v467 = vsel %vm466, 0.0, %v464
    %v468 = vsel %vm42, 1, 0
    %vm469 = vcmp.eq.s32.totalorder %v468, 1
    %v470 = vsel %vm469, 0.0, %v467
    %v471 = vld [vmem:[#allocation2 + $0x48] sm:$0xff]
    %v473 = vsel %vm224, %v471, 0
    %475 = vmatprep.subr.mxu0 0.0
    %476 = vmatpush1.msra.mxu0 0.0
    %477 = vmatprep.subr.mxu0 0.0
    %478 = vmatpush1.msra.mxu0 0.0
    %479 = vmatprep.subr.mxu0 0.0
    %480 = vmatpush1.msra.mxu0 0.0
    %481 = vmatprep.subr.mxu0 0.0
    %482 = vmatpush1.msra.mxu0 0.0
    %483 = vmatprep.subr.mxu0 0.0
    %484 = vmatpush1.msra.mxu0 0.0
    %485 = vmatprep.subr.mxu0 0.0
    %486 = vmatpush1.msra.mxu0 0.0
    %487 = vmatprep.subr.mxu0 0.0
    %488 = vmatpush1.msra.mxu0 0.0
    %489 = vmatprep.subr.mxu0 0.0
    %490 = vmatpush1.msra.mxu0 0.0
    %491 = vmatprep.subr.mxu0 0.0
    %492 = vmatpush1.msra.mxu0 0.0
    %493 = vmatprep.subr.mxu0 0.0
    %494 = vmatpush1.msra.mxu0 0.0
    %495 = vmatprep.subr.mxu0 0.0
    %496 = vmatpush1.msra.mxu0 0.0
    %497 = vmatprep.subr.mxu0 0.0
    %498 = vmatpush1.msra.mxu0 0.0
    %499 = vmatprep.subr.mxu0 0.0
    %500 = vmatpush1.msra.mxu0 0.0
    %501 = vmatprep.subr.mxu0 0.0
    %502 = vmatpush1.msra.mxu0 0.0
    %503 = vmatprep.subr.mxu0 0.0
    %504 = vmatpush1.msra.mxu0 0.0
    %505 = vmatprep.subr.mxu0 0.0
    %506 = vmatpush1.msra.mxu0 %v460
    %507 = vmatprep.subr.mxu0 0.0
    %508 = vmatpush2.msra.mxu0 0.0
    %509 = vmatprep.subr.mxu0 0.0
    %510 = vmatpush2.msra.mxu0 0.0
    %511 = vmatprep.subr.mxu0 0.0
    %512 = vmatpush2.msra.mxu0 0.0
    %513 = vmatprep.subr.mxu0 0.0
    %514 = vmatpush2.msra.mxu0 0.0
    %515 = vmatprep.subr.mxu0 0.0
    %516 = vmatpush2.msra.mxu0 0.0
    %517 = vmatprep.subr.mxu0 0.0
    %518 = vmatpush2.msra.mxu0 0.0
    %519 = vmatprep.subr.mxu0 0.0
    %520 = vmatpush2.msra.mxu0 0.0
    %521 = vmatprep.subr.mxu0 0.0
    %522 = vmatpush2.msra.mxu0 0.0
    %523 = vmatprep.subr.mxu0 0.0
    %524 = vmatpush2.msra.mxu0 0.0
    %525 = vmatprep.subr.mxu0 0.0
    %526 = vmatpush2.msra.mxu0 0.0
    %527 = vmatprep.subr.mxu0 0.0
    %528 = vmatpush2.msra.mxu0 0.0
    %529 = vmatprep.subr.mxu0 0.0
    %530 = vmatpush2.msra.mxu0 0.0
    %531 = vmatprep.subr.mxu0 0.0
    %532 = vmatpush2.msra.mxu0 0.0
    %533 = vmatprep.subr.mxu0 0.0
    %534 = vmatpush2.msra.mxu0 0.0
    %535 = vmatprep.subr.mxu0 0.0
    %536 = vmatpush2.msra.mxu0 0.0
    %537 = vmatprep.subr.mxu0 0.0
    %538 = vmatpush2.msra.mxu0 0.0
    %539 = vmatprep.mubr.f32.mxu0 0.0
    %540 = vmatmul.mubr.f32.gmra.mxu0 %v473
    %v541 = vpop.f32.mrf.mxu0
    %v542 = vadd.f32 0.0, %v541
    %v543 = vpop.f32.mrf.mxu0
    %544 = vdwg.mxu0
    %v546 = vsel %vm224, %v461, 0
    %548 = vmatprep.subr.mxu0 0.0
    %549 = vmatpush1.msra.mxu0 0.0
    %550 = vmatprep.subr.mxu0 0.0
    %551 = vmatpush1.msra.mxu0 0.0
    %552 = vmatprep.subr.mxu0 0.0
    %553 = vmatpush1.msra.mxu0 0.0
    %554 = vmatprep.subr.mxu0 0.0
    %555 = vmatpush1.msra.mxu0 0.0
    %556 = vmatprep.subr.mxu0 0.0
    %557 = vmatpush1.msra.mxu0 0.0
    %558 = vmatprep.subr.mxu0 0.0
    %559 = vmatpush1.msra.mxu0 0.0
    %560 = vmatprep.subr.mxu0 0.0
    %561 = vmatpush1.msra.mxu0 0.0
    %562 = vmatprep.subr.mxu0 0.0
    %563 = vmatpush1.msra.mxu0 0.0
    %564 = vmatprep.subr.mxu0 0.0
    %565 = vmatpush1.msra.mxu0 0.0
    %566 = vmatprep.subr.mxu0 0.0
    %567 = vmatpush1.msra.mxu0 0.0
    %568 = vmatprep.subr.mxu0 0.0
    %569 = vmatpush1.msra.mxu0 0.0
    %570 = vmatprep.subr.mxu0 0.0
    %571 = vmatpush1.msra.mxu0 0.0
    %572 = vmatprep.subr.mxu0 0.0
    %573 = vmatpush1.msra.mxu0 0.0
    %574 = vmatprep.subr.mxu0 0.0
    %575 = vmatpush1.msra.mxu0 0.0
    %576 = vmatprep.subr.mxu0 0.0
    %577 = vmatpush1.msra.mxu0 0.0
    %578 = vmatprep.subr.mxu0 0.0
    %579 = vmatpush1.msra.mxu0 %v470
    %580 = vmatprep.subr.mxu0 0.0
    %581 = vmatpush2.msra.mxu0 0.0
    %582 = vmatprep.subr.mxu0 0.0
    %583 = vmatpush2.msra.mxu0 0.0
    %584 = vmatprep.subr.mxu0 0.0
    %585 = vmatpush2.msra.mxu0 0.0
    %586 = vmatprep.subr.mxu0 0.0
    %587 = vmatpush2.msra.mxu0 0.0
    %588 = vmatprep.subr.mxu0 0.0
    %589 = vmatpush2.msra.mxu0 0.0
    %590 = vmatprep.subr.mxu0 0.0
    %591 = vmatpush2.msra.mxu0 0.0
    %592 = vmatprep.subr.mxu0 0.0
    %593 = vmatpush2.msra.mxu0 0.0
    %594 = vmatprep.subr.mxu0 0.0
    %595 = vmatpush2.msra.mxu0 0.0
    %596 = vmatprep.subr.mxu0 0.0
    %597 = vmatpush2.msra.mxu0 0.0
    %598 = vmatprep.subr.mxu0 0.0
    %599 = vmatpush2.msra.mxu0 0.0
    %600 = vmatprep.subr.mxu0 0.0
    %601 = vmatpush2.msra.mxu0 0.0
    %602 = vmatprep.subr.mxu0 0.0
    %603 = vmatpush2.msra.mxu0 0.0
    %604 = vmatprep.subr.mxu0 0.0
    %605 = vmatpush2.msra.mxu0 0.0
    %606 = vmatprep.subr.mxu0 0.0
    %607 = vmatpush2.msra.mxu0 0.0
    %608 = vmatprep.subr.mxu0 0.0
    %609 = vmatpush2.msra.mxu0 0.0
    %610 = vmatprep.subr.mxu0 0.0
    %611 = vmatpush2.msra.mxu0 0.0
    %612 = vmatprep.mubr.f32.mxu0 0.0
    %613 = vmatmul.mubr.f32.gmra.mxu0 %v546
    %v614 = vpop.f32.mrf.mxu0
    %v615 = vadd.f32 %v542, %v614
    %v616 = vpop.f32.mrf.mxu0
    %617 = vdwg.mxu0
    %v618 = vld [vmem:[#allocation2 + $0x50] sm:$0xff]
    %620 = vset.pattern.permute.xlu0 0
    %621 = vperm.xlu0 %620, %v618
    %v622 = vpop.permute.xlu0 %621
    %v624 = vadd.f32 %v615, %v622
    %v625 = vmax.f32 %v624, 0.0
    %v626 = vld [vmem:[#allocation2 + $0x58] sm:$0xff]
    %628 = vrot.lane.b32.xlu0 %v625, 2
    %v629 = vpop.permute.xlu0 %628
    %v631 = vsel %vm466, 0.0, %v629
    %v632 = vsel %vm469, 0.0, %v631
    %v633 = vld [vmem:[#allocation2 + $0x60] sm:$0xff]
    %v635 = vsel %vm224, %v633, 0
    %637 = vmatprep.subr.mxu0 0.0
    %638 = vmatpush1.msra.mxu0 0.0
    %639 = vmatprep.subr.mxu0 0.0
    %640 = vmatpush1.msra.mxu0 0.0
    %641 = vmatprep.subr.mxu0 0.0
    %642 = vmatpush1.msra.mxu0 0.0
    %643 = vmatprep.subr.mxu0 0.0
    %644 = vmatpush1.msra.mxu0 0.0
    %645 = vmatprep.subr.mxu0 0.0
    %646 = vmatpush1.msra.mxu0 0.0
    %647 = vmatprep.subr.mxu0 0.0
    %648 = vmatpush1.msra.mxu0 0.0
    %649 = vmatprep.subr.mxu0 0.0
    %650 = vmatpush1.msra.mxu0 0.0
    %651 = vmatprep.subr.mxu0 0.0
    %652 = vmatpush1.msra.mxu0 0.0
    %653 = vmatprep.subr.mxu0 0.0
    %654 = vmatpush1.msra.mxu0 0.0
    %655 = vmatprep.subr.mxu0 0.0
    %656 = vmatpush1.msra.mxu0 0.0
    %657 = vmatprep.subr.mxu0 0.0
    %658 = vmatpush1.msra.mxu0 0.0
    %659 = vmatprep.subr.mxu0 0.0
    %660 = vmatpush1.msra.mxu0 0.0
    %661 = vmatprep.subr.mxu0 0.0
    %662 = vmatpush1.msra.mxu0 0.0
    %663 = vmatprep.subr.mxu0 0.0
    %664 = vmatpush1.msra.mxu0 0.0
    %665 = vmatprep.subr.mxu0 0.0
    %666 = vmatpush1.msra.mxu0 0.0
    %667 = vmatprep.subr.mxu0 0.0
    %668 = vmatpush1.msra.mxu0 %v625
    %669 = vmatprep.subr.mxu0 0.0
    %670 = vmatpush2.msra.mxu0 0.0
    %671 = vmatprep.subr.mxu0 0.0
    %672 = vmatpush2.msra.mxu0 0.0
    %673 = vmatprep.subr.mxu0 0.0
    %674 = vmatpush2.msra.mxu0 0.0
    %675 = vmatprep.subr.mxu0 0.0
    %676 = vmatpush2.msra.mxu0 0.0
    %677 = vmatprep.subr.mxu0 0.0
    %678 = vmatpush2.msra.mxu0 0.0
    %679 = vmatprep.subr.mxu0 0.0
    %680 = vmatpush2.msra.mxu0 0.0
    %681 = vmatprep.subr.mxu0 0.0
    %682 = vmatpush2.msra.mxu0 0.0
    %683 = vmatprep.subr.mxu0 0.0
    %684 = vmatpush2.msra.mxu0 0.0
    %685 = vmatprep.subr.mxu0 0.0
    %686 = vmatpush2.msra.mxu0 0.0
    %687 = vmatprep.subr.mxu0 0.0
    %688 = vmatpush2.msra.mxu0 0.0
    %689 = vmatprep.subr.mxu0 0.0
    %690 = vmatpush2.msra.mxu0 0.0
    %691 = vmatprep.subr.mxu0 0.0
    %692 = vmatpush2.msra.mxu0 0.0
    %693 = vmatprep.subr.mxu0 0.0
    %694 = vmatpush2.msra.mxu0 0.0
    %695 = vmatprep.subr.mxu0 0.0
    %696 = vmatpush2.msra.mxu0 0.0
    %697 = vmatprep.subr.mxu0 0.0
    %698 = vmatpush2.msra.mxu0 0.0
    %699 = vmatprep.subr.mxu0 0.0
    %700 = vmatpush2.msra.mxu0 0.0
    %701 = vmatprep.mubr.f32.mxu0 0.0
    %702 = vmatmul.mubr.f32.gmra.mxu0 %v635
    %v703 = vpop.f32.mrf.mxu0
    %v704 = vadd.f32 0.0, %v703
    %v705 = vpop.f32.mrf.mxu0
    %706 = vdwg.mxu0
    %v708 = vsel %vm224, %v626, 0
    %710 = vmatprep.subr.mxu0 0.0
    %711 = vmatpush1.msra.mxu0 0.0
    %712 = vmatprep.subr.mxu0 0.0
    %713 = vmatpush1.msra.mxu0 0.0
    %714 = vmatprep.subr.mxu0 0.0
    %715 = vmatpush1.msra.mxu0 0.0
    %716 = vmatprep.subr.mxu0 0.0
    %717 = vmatpush1.msra.mxu0 0.0
    %718 = vmatprep.subr.mxu0 0.0
    %719 = vmatpush1.msra.mxu0 0.0
    %720 = vmatprep.subr.mxu0 0.0
    %721 = vmatpush1.msra.mxu0 0.0
    %722 = vmatprep.subr.mxu0 0.0
    %723 = vmatpush1.msra.mxu0 0.0
    %724 = vmatprep.subr.mxu0 0.0
    %725 = vmatpush1.msra.mxu0 0.0
    %726 = vmatprep.subr.mxu0 0.0
    %727 = vmatpush1.msra.mxu0 0.0
    %728 = vmatprep.subr.mxu0 0.0
    %729 = vmatpush1.msra.mxu0 0.0
    %730 = vmatprep.subr.mxu0 0.0
    %731 = vmatpush1.msra.mxu0 0.0
    %732 = vmatprep.subr.mxu0 0.0
    %733 = vmatpush1.msra.mxu0 0.0
    %734 = vmatprep.subr.mxu0 0.0
    %735 = vmatpush1.msra.mxu0 0.0
    %736 = vmatprep.subr.mxu0 0.0
    %737 = vmatpush1.msra.mxu0 0.0
    %738 = vmatprep.subr.mxu0 0.0
    %739 = vmatpush1.msra.mxu0 0.0
    %740 = vmatprep.subr.mxu0 0.0
    %741 = vmatpush1.msra.mxu0 %v632
    %742 = vmatprep.subr.mxu0 0.0
    %743 = vmatpush2.msra.mxu0 0.0
    %744 = vmatprep.subr.mxu0 0.0
    %745 = vmatpush2.msra.mxu0 0.0
    %746 = vmatprep.subr.mxu0 0.0
    %747 = vmatpush2.msra.mxu0 0.0
    %748 = vmatprep.subr.mxu0 0.0
    %749 = vmatpush2.msra.mxu0 0.0
    %750 = vmatprep.subr.mxu0 0.0
    %751 = vmatpush2.msra.mxu0 0.0
    %752 = vmatprep.subr.mxu0 0.0
    %753 = vmatpush2.msra.mxu0 0.0
    %754 = vmatprep.subr.mxu0 0.0
    %755 = vmatpush2.msra.mxu0 0.0
    %756 = vmatprep.subr.mxu0 0.0
    %757 = vmatpush2.msra.mxu0 0.0
    %758 = vmatprep.subr.mxu0 0.0
    %759 = vmatpush2.msra.mxu0 0.0
    %760 = vmatprep.subr.mxu0 0.0
    %761 = vmatpush2.msra.mxu0 0.0
    %762 = vmatprep.subr.mxu0 0.0
    %763 = vmatpush2.msra.mxu0 0.0
    %764 = vmatprep.subr.mxu0 0.0
    %765 = vmatpush2.msra.mxu0 0.0
    %766 = vmatprep.subr.mxu0 0.0
    %767 = vmatpush2.msra.mxu0 0.0
    %768 = vmatprep.subr.mxu0 0.0
    %769 = vmatpush2.msra.mxu0 0.0
    %770 = vmatprep.subr.mxu0 0.0
    %771 = vmatpush2.msra.mxu0 0.0
    %772 = vmatprep.subr.mxu0 0.0
    %773 = vmatpush2.msra.mxu0 0.0
    %774 = vmatprep.mubr.f32.mxu0 0.0
    %775 = vmatmul.mubr.f32.gmra.mxu0 %v708
    %v776 = vpop.f32.mrf.mxu0
    %v777 = vadd.f32 %v704, %v776
    %v778 = vpop.f32.mrf.mxu0
    %779 = vdwg.mxu0
    %v780 = vld [vmem:[#allocation2 + $0x68] sm:$0xff]
    %782 = vset.pattern.permute.xlu0 0
    %783 = vperm.xlu0 %782, %v780
    %v784 = vpop.permute.xlu0 %783
    %v786 = vadd.f32 %v777, %v784
    %v787 = vmax.f32 %v786, 0.0
    %v788 = vadd.f32 %v787, %v460
    %v789 = vmax.f32 %v788, 0.0
    %v790 = vld [vmem:[#allocation2 + $0x70] sm:$0x1]
    %792 = vrot.lane.b32.xlu0 %v789, 4
    %v793 = vpop.permute.xlu0 %792
    %v795 = vsel %vm55, 0.0, %v793
    %v796 = vsel %vm43, 1, 0
    %vm797 = vcmp.eq.s32.totalorder %v796, 1
    %v798 = vsel %vm797, 0.0, %v795
    %v799 = vld [vmem:[#allocation2 + $0x78] sm:$0x1]
    %v801 = vsel %vm224, %v799, 0
    %803 = vmatprep.subr.mxu0 0.0
    %804 = vmatpush1.msra.mxu0 0.0
    %805 = vmatprep.subr.mxu0 0.0
    %806 = vmatpush1.msra.mxu0 0.0
    %807 = vmatprep.subr.mxu0 0.0
    %808 = vmatpush1.msra.mxu0 0.0
    %809 = vmatprep.subr.mxu0 0.0
    %810 = vmatpush1.msra.mxu0 0.0
    %811 = vmatprep.subr.mxu0 0.0
    %812 = vmatpush1.msra.mxu0 0.0
    %813 = vmatprep.subr.mxu0 0.0
    %814 = vmatpush1.msra.mxu0 0.0
    %815 = vmatprep.subr.mxu0 0.0
    %816 = vmatpush1.msra.mxu0 0.0
    %817 = vmatprep.subr.mxu0 0.0
    %818 = vmatpush1.msra.mxu0 0.0
    %819 = vmatprep.subr.mxu0 0.0
    %820 = vmatpush1.msra.mxu0 0.0
    %821 = vmatprep.subr.mxu0 0.0
    %822 = vmatpush1.msra.mxu0 0.0
    %823 = vmatprep.subr.mxu0 0.0
    %824 = vmatpush1.msra.mxu0 0.0
    %825 = vmatprep.subr.mxu0 0.0
    %826 = vmatpush1.msra.mxu0 0.0
    %827 = vmatprep.subr.mxu0 0.0
    %828 = vmatpush1.msra.mxu0 0.0
    %829 = vmatprep.subr.mxu0 0.0
    %830 = vmatpush1.msra.mxu0 0.0
    %831 = vmatprep.subr.mxu0 0.0
    %832 = vmatpush1.msra.mxu0 0.0
    %833 = vmatprep.subr.mxu0 0.0
    %834 = vmatpush1.msra.mxu0 %v789
    %835 = vmatprep.subr.mxu0 0.0
    %836 = vmatpush2.msra.mxu0 0.0
    %837 = vmatprep.subr.mxu0 0.0
    %838 = vmatpush2.msra.mxu0 0.0
    %839 = vmatprep.subr.mxu0 0.0
    %840 = vmatpush2.msra.mxu0 0.0
    %841 = vmatprep.subr.mxu0 0.0
    %842 = vmatpush2.msra.mxu0 0.0
    %843 = vmatprep.subr.mxu0 0.0
    %844 = vmatpush2.msra.mxu0 0.0
    %845 = vmatprep.subr.mxu0 0.0
    %846 = vmatpush2.msra.mxu0 0.0
    %847 = vmatprep.subr.mxu0 0.0
    %848 = vmatpush2.msra.mxu0 0.0
    %849 = vmatprep.subr.mxu0 0.0
    %850 = vmatpush2.msra.mxu0 0.0
    %851 = vmatprep.subr.mxu0 0.0
    %852 = vmatpush2.msra.mxu0 0.0
    %853 = vmatprep.subr.mxu0 0.0
    %854 = vmatpush2.msra.mxu0 0.0
    %855 = vmatprep.subr.mxu0 0.0
    %856 = vmatpush2.msra.mxu0 0.0
    %857 = vmatprep.subr.mxu0 0.0
    %858 = vmatpush2.msra.mxu0 0.0
    %859 = vmatprep.subr.mxu0 0.0
    %860 = vmatpush2.msra.mxu0 0.0
    %861 = vmatprep.subr.mxu0 0.0
    %862 = vmatpush2.msra.mxu0 0.0
    %863 = vmatprep.subr.mxu0 0.0
    %864 = vmatpush2.msra.mxu0 0.0
    %865 = vmatprep.subr.mxu0 0.0
    %866 = vmatpush2.msra.mxu0 0.0
    %867 = vmatprep.mubr.f32.mxu0 0.0
    %868 = vmatmul.mubr.f32.gmra.mxu0 %v801
    %v869 = vpop.f32.mrf.mxu0
    %v870 = vadd.f32 0.0, %v869
    %v871 = vpop.f32.mrf.mxu0
    %872 = vdwg.mxu0
    %v874 = vsel %vm224, %v790, 0
    %876 = vmatprep.subr.mxu0 0.0
    %877 = vmatpush1.msra.mxu0 0.0
    %878 = vmatprep.subr.mxu0 0.0
    %879 = vmatpush1.msra.mxu0 0.0
    %880 = vmatprep.subr.mxu0 0.0
    %881 = vmatpush1.msra.mxu0 0.0
    %882 = vmatprep.subr.mxu0 0.0
    %883 = vmatpush1.msra.mxu0 0.0
    %884 = vmatprep.subr.mxu0 0.0
    %885 = vmatpush1.msra.mxu0 0.0
    %886 = vmatprep.subr.mxu0 0.0
    %887 = vmatpush1.msra.mxu0 0.0
    %888 = vmatprep.subr.mxu0 0.0
    %889 = vmatpush1.msra.mxu0 0.0
    %890 = vmatprep.subr.mxu0 0.0
    %891 = vmatpush1.msra.mxu0 0.0
    %892 = vmatprep.subr.mxu0 0.0
    %893 = vmatpush1.msra.mxu0 0.0
    %894 = vmatprep.subr.mxu0 0.0
    %895 = vmatpush1.msra.mxu0 0.0
    %896 = vmatprep.subr.mxu0 0.0
    %897 = vmatpush1.msra.mxu0 0.0
    %898 = vmatprep.subr.mxu0 0.0
    %899 = vmatpush1.msra.mxu0 0.0
    %900 = vmatprep.subr.mxu0 0.0
    %901 = vmatpush1.msra.mxu0 0.0
    %902 = vmatprep.subr.mxu0 0.0
    %903 = vmatpush1.msra.mxu0 0.0
    %904 = vmatprep.subr.mxu0 0.0
    %905 = vmatpush1.msra.mxu0 0.0
    %906 = vmatprep.subr.mxu0 0.0
    %907 = vmatpush1.msra.mxu0 %v798
    %908 = vmatprep.subr.mxu0 0.0
    %909 = vmatpush2.msra.mxu0 0.0
    %910 = vmatprep.subr.mxu0 0.0
    %911 = vmatpush2.msra.mxu0 0.0
    %912 = vmatprep.subr.mxu0 0.0
    %913 = vmatpush2.msra.mxu0 0.0
    %914 = vmatprep.subr.mxu0 0.0
    %915 = vmatpush2.msra.mxu0 0.0
    %916 = vmatprep.subr.mxu0 0.0
    %917 = vmatpush2.msra.mxu0 0.0
    %918 = vmatprep.subr.mxu0 0.0
    %919 = vmatpush2.msra.mxu0 0.0
    %920 = vmatprep.subr.mxu0 0.0
    %921 = vmatpush2.msra.mxu0 0.0
    %922 = vmatprep.subr.mxu0 0.0
    %923 = vmatpush2.msra.mxu0 0.0
    %924 = vmatprep.subr.mxu0 0.0
    %925 = vmatpush2.msra.mxu0 0.0
    %926 = vmatprep.subr.mxu0 0.0
    %927 = vmatpush2.msra.mxu0 0.0
    %928 = vmatprep.subr.mxu0 0.0
    %929 = vmatpush2.msra.mxu0 0.0
    %930 = vmatprep.subr.mxu0 0.0
    %931 = vmatpush2.msra.mxu0 0.0
    %932 = vmatprep.subr.mxu0 0.0
    %933 = vmatpush2.msra.mxu0 0.0
    %934 = vmatprep.subr.mxu0 0.0
    %935 = vmatpush2.msra.mxu0 0.0
    %936 = vmatprep.subr.mxu0 0.0
    %937 = vmatpush2.msra.mxu0 0.0
    %938 = vmatprep.subr.mxu0 0.0
    %939 = vmatpush2.msra.mxu0 0.0
    %940 = vmatprep.mubr.f32.mxu0 0.0
    %941 = vmatmul.mubr.f32.gmra.mxu0 %v874
    %v942 = vpop.f32.mrf.mxu0
    %v943 = vadd.f32 %v870, %v942
    %v944 = vpop.f32.mrf.mxu0
    %945 = vdwg.mxu0
    %v946 = vld [vmem:[#allocation2 + $0x80] sm:$0x1]
    %948 = vset.pattern.permute.xlu0 0
    %949 = vperm.xlu0 %948, %v946
    %v950 = vpop.permute.xlu0 %949
    %v952 = vadd.f32 %v943, %v950
    %v953 = vmax.f32 %v952, 0.0
    %v954 = vld [vmem:[#allocation2 + $0x88] sm:$0x1]
    %956 = vrot.lane.b32.xlu0 %v953, 4
    %v957 = vpop.permute.xlu0 %956
    %v959 = vsel %vm55, 0.0, %v957
    %v960 = vsel %vm43, 0.0, %v959
    %v961 = vld [vmem:[#allocation2 + $0x90] sm:$0x1]
    %v963 = vsel %vm49, %v961, 0
    %vm965 = vcmask 1040384
    %v966 = vsel %vm965, %v953, 0
    %968 = vmatprep.subr.mxu0 0.0
    %969 = vmatpush1.msra.mxu0 0.0
    %970 = vmatprep.subr.mxu0 0.0
    %971 = vmatpush1.msra.mxu0 0.0
    %972 = vmatprep.subr.mxu0 0.0
    %973 = vmatpush1.msra.mxu0 0.0
    %974 = vmatprep.subr.mxu0 0.0
    %975 = vmatpush1.msra.mxu0 0.0
    %976 = vmatprep.subr.mxu0 0.0
    %977 = vmatpush1.msra.mxu0 0.0
    %978 = vmatprep.subr.mxu0 0.0
    %979 = vmatpush1.msra.mxu0 0.0
    %980 = vmatprep.subr.mxu0 0.0
    %981 = vmatpush1.msra.mxu0 0.0
    %982 = vmatprep.subr.mxu0 0.0
    %983 = vmatpush1.msra.mxu0 0.0
    %984 = vmatprep.subr.mxu0 0.0
    %985 = vmatpush1.msra.mxu0 0.0
    %986 = vmatprep.subr.mxu0 0.0
    %987 = vmatpush1.msra.mxu0 0.0
    %988 = vmatprep.subr.mxu0 0.0
    %989 = vmatpush1.msra.mxu0 0.0
    %990 = vmatprep.subr.mxu0 0.0
    %991 = vmatpush1.msra.mxu0 0.0
    %992 = vmatprep.subr.mxu0 0.0
    %993 = vmatpush1.msra.mxu0 0.0
    %994 = vmatprep.subr.mxu0 0.0
    %995 = vmatpush1.msra.mxu0 0.0
    %996 = vmatprep.subr.mxu0 0.0
    %997 = vmatpush1.msra.mxu0 0.0
    %998 = vmatprep.subr.mxu0 0.0
    %999 = vmatpush1.msra.mxu0 %v966
    %1000 = vmatprep.subr.mxu0 0.0
    %1001 = vmatpush2.msra.mxu0 0.0
    %1002 = vmatprep.subr.mxu0 0.0
    %1003 = vmatpush2.msra.mxu0 0.0
    %1004 = vmatprep.subr.mxu0 0.0
    %1005 = vmatpush2.msra.mxu0 0.0
    %1006 = vmatprep.subr.mxu0 0.0
    %1007 = vmatpush2.msra.mxu0 0.0
    %1008 = vmatprep.subr.mxu0 0.0
    %1009 = vmatpush2.msra.mxu0 0.0
    %1010 = vmatprep.subr.mxu0 0.0
    %1011 = vmatpush2.msra.mxu0 0.0
    %1012 = vmatprep.subr.mxu0 0.0
    %1013 = vmatpush2.msra.mxu0 0.0
    %1014 = vmatprep.subr.mxu0 0.0
    %1015 = vmatpush2.msra.mxu0 0.0
    %1016 = vmatprep.subr.mxu0 0.0
    %1017 = vmatpush2.msra.mxu0 0.0
    %1018 = vmatprep.subr.mxu0 0.0
    %1019 = vmatpush2.msra.mxu0 0.0
    %1020 = vmatprep.subr.mxu0 0.0
    %1021 = vmatpush2.msra.mxu0 0.0
    %1022 = vmatprep.subr.mxu0 0.0
    %1023 = vmatpush2.msra.mxu0 0.0
    %1024 = vmatprep.subr.mxu0 0.0
    %1025 = vmatpush2.msra.mxu0 0.0
    %1026 = vmatprep.subr.mxu0 0.0
    %1027 = vmatpush2.msra.mxu0 0.0
    %1028 = vmatprep.subr.mxu0 0.0
    %1029 = vmatpush2.msra.mxu0 0.0
    %1030 = vmatprep.subr.mxu0 0.0
    %1031 = vmatpush2.msra.mxu0 0.0
    %1032 = vmatprep.mubr.f32.mxu0 0.0
    %1033 = vmatmul.mubr.f32.gmra.mxu0 %v963
    %v1034 = vpop.f32.mrf.mxu0
    %v1035 = vadd.f32 0.0, %v1034
    %v1036 = vpop.f32.mrf.mxu0
    %1037 = vdwg.mxu0
    %v1039 = vsel %vm49, %v954, 0
    %v1042 = vsel %vm965, %v960, 0
    %1044 = vmatprep.subr.mxu0 0.0
    %1045 = vmatpush1.msra.mxu0 0.0
    %1046 = vmatprep.subr.mxu0 0.0
    %1047 = vmatpush1.msra.mxu0 0.0
    %1048 = vmatprep.subr.mxu0 0.0
    %1049 = vmatpush1.msra.mxu0 0.0
    %1050 = vmatprep.subr.mxu0 0.0
    %1051 = vmatpush1.msra.mxu0 0.0
    %1052 = vmatprep.subr.mxu0 0.0
    %1053 = vmatpush1.msra.mxu0 0.0
    %1054 = vmatprep.subr.mxu0 0.0
    %1055 = vmatpush1.msra.mxu0 0.0
    %1056 = vmatprep.subr.mxu0 0.0
    %1057 = vmatpush1.msra.mxu0 0.0
    %1058 = vmatprep.subr.mxu0 0.0
    %1059 = vmatpush1.msra.mxu0 0.0
    %1060 = vmatprep.subr.mxu0 0.0
    %1061 = vmatpush1.msra.mxu0 0.0
    %1062 = vmatprep.subr.mxu0 0.0
    %1063 = vmatpush1.msra.mxu0 0.0
    %1064 = vmatprep.subr.mxu0 0.0
    %1065 = vmatpush1.msra.mxu0 0.0
    %1066 = vmatprep.subr.mxu0 0.0
    %1067 = vmatpush1.msra.mxu0 0.0
    %1068 = vmatprep.subr.mxu0 0.0
    %1069 = vmatpush1.msra.mxu0 0.0
    %1070 = vmatprep.subr.mxu0 0.0
    %1071 = vmatpush1.msra.mxu0 0.0
    %1072 = vmatprep.subr.mxu0 0.0
    %1073 = vmatpush1.msra.mxu0 0.0
    %1074 = vmatprep.subr.mxu0 0.0
    %1075 = vmatpush1.msra.mxu0 %v1042
    %1076 = vmatprep.subr.mxu0 0.0
    %1077 = vmatpush2.msra.mxu0 0.0
    %1078 = vmatprep.subr.mxu0 0.0
    %1079 = vmatpush2.msra.mxu0 0.0
    %1080 = vmatprep.subr.mxu0 0.0
    %1081 = vmatpush2.msra.mxu0 0.0
    %1082 = vmatprep.subr.mxu0 0.0
    %1083 = vmatpush2.msra.mxu0 0.0
    %1084 = vmatprep.subr.mxu0 0.0
    %1085 = vmatpush2.msra.mxu0 0.0
    %1086 = vmatprep.subr.mxu0 0.0
    %1087 = vmatpush2.msra.mxu0 0.0
    %1088 = vmatprep.subr.mxu0 0.0
    %1089 = vmatpush2.msra.mxu0 0.0
    %1090 = vmatprep.subr.mxu0 0.0
    %1091 = vmatpush2.msra.mxu0 0.0
    %1092 = vmatprep.subr.mxu0 0.0
    %1093 = vmatpush2.msra.mxu0 0.0
    %1094 = vmatprep.subr.mxu0 0.0
    %1095 = vmatpush2.msra.mxu0 0.0
    %1096 = vmatprep.subr.mxu0 0.0
    %1097 = vmatpush2.msra.mxu0 0.0
    %1098 = vmatprep.subr.mxu0 0.0
    %1099 = vmatpush2.msra.mxu0 0.0
    %1100 = vmatprep.subr.mxu0 0.0
    %1101 = vmatpush2.msra.mxu0 0.0
    %1102 = vmatprep.subr.mxu0 0.0
    %1103 = vmatpush2.msra.mxu0 0.0
    %1104 = vmatprep.subr.mxu0 0.0
    %1105 = vmatpush2.msra.mxu0 0.0
    %1106 = vmatprep.subr.mxu0 0.0
    %1107 = vmatpush2.msra.mxu0 0.0
    %1108 = vmatprep.mubr.f32.mxu0 0.0
    %1109 = vmatmul.mubr.f32.gmra.mxu0 %v1039
    %v1110 = vpop.f32.mrf.mxu0
    %v1111 = vadd.f32 %v1035, %v1110
    %v1112 = vpop.f32.mrf.mxu0
    %1113 = vdwg.mxu0
    %v1114 = vld [vmem:[#allocation2 + $0x98] sm:$0x1]
    %1116 = vset.pattern.permute.xlu0 0
    %1117 = vperm.xlu0 %1116, %v1114
    %v1118 = vpop.permute.xlu0 %1117
    %v1120 = vadd.f32 %v1111, %v1118
    %v1121 = vmax.f32 %v1120, 0.0
    %v1122 = vld [vmem:[#allocation2 + $0xa0] sm:$0x1]
    %v1123 = vld [vmem:[#allocation2 + $0xa8] sm:$0x1]
    %1125 = vset.pattern.permute.xlu0 0
    %1126 = vperm.xlu0 %1125, %v1123
    %v1127 = vpop.permute.xlu0 %1126
    %v1130 = vsel %vm224, %v1122, 0
    %1132 = vmatprep.subr.mxu0 0.0
    %1133 = vmatpush1.msra.mxu0 0.0
    %1134 = vmatprep.subr.mxu0 0.0
    %1135 = vmatpush1.msra.mxu0 0.0
    %1136 = vmatprep.subr.mxu0 0.0
    %1137 = vmatpush1.msra.mxu0 0.0
    %1138 = vmatprep.subr.mxu0 0.0
    %1139 = vmatpush1.msra.mxu0 0.0
    %1140 = vmatprep.subr.mxu0 0.0
    %1141 = vmatpush1.msra.mxu0 0.0
    %1142 = vmatprep.subr.mxu0 0.0
    %1143 = vmatpush1.msra.mxu0 0.0
    %1144 = vmatprep.subr.mxu0 0.0
    %1145 = vmatpush1.msra.mxu0 0.0
    %1146 = vmatprep.subr.mxu0 0.0
    %1147 = vmatpush1.msra.mxu0 0.0
    %1148 = vmatprep.subr.mxu0 0.0
    %1149 = vmatpush1.msra.mxu0 0.0
    %1150 = vmatprep.subr.mxu0 0.0
    %1151 = vmatpush1.msra.mxu0 0.0
    %1152 = vmatprep.subr.mxu0 0.0
    %1153 = vmatpush1.msra.mxu0 0.0
    %1154 = vmatprep.subr.mxu0 0.0
    %1155 = vmatpush1.msra.mxu0 0.0
    %1156 = vmatprep.subr.mxu0 0.0
    %1157 = vmatpush1.msra.mxu0 0.0
    %1158 = vmatprep.subr.mxu0 0.0
    %1159 = vmatpush1.msra.mxu0 0.0
    %1160 = vmatprep.subr.mxu0 0.0
    %1161 = vmatpush1.msra.mxu0 0.0
    %1162 = vmatprep.subr.mxu0 0.0
    %1163 = vmatpush1.msra.mxu0 %v789
    %1164 = vmatprep.subr.mxu0 0.0
    %1165 = vmatpush2.msra.mxu0 0.0
    %1166 = vmatprep.subr.mxu0 0.0
    %1167 = vmatpush2.msra.mxu0 0.0
    %1168 = vmatprep.subr.mxu0 0.0
    %1169 = vmatpush2.msra.mxu0 0.0
    %1170 = vmatprep.subr.mxu0 0.0
    %1171 = vmatpush2.msra.mxu0 0.0
    %1172 = vmatprep.subr.mxu0 0.0
    %1173 = vmatpush2.msra.mxu0 0.0
    %1174 = vmatprep.subr.mxu0 0.0
    %1175 = vmatpush2.msra.mxu0 0.0
    %1176 = vmatprep.subr.mxu0 0.0
    %1177 = vmatpush2.msra.mxu0 0.0
    %1178 = vmatprep.subr.mxu0 0.0
    %1179 = vmatpush2.msra.mxu0 0.0
    %1180 = vmatprep.subr.mxu0 0.0
    %1181 = vmatpush2.msra.mxu0 0.0
    %1182 = vmatprep.subr.mxu0 0.0
    %1183 = vmatpush2.msra.mxu0 0.0
    %1184 = vmatprep.subr.mxu0 0.0
    %1185 = vmatpush2.msra.mxu0 0.0
    %1186 = vmatprep.subr.mxu0 0.0
    %1187 = vmatpush2.msra.mxu0 0.0
    %1188 = vmatprep.subr.mxu0 0.0
    %1189 = vmatpush2.msra.mxu0 0.0
    %1190 = vmatprep.subr.mxu0 0.0
    %1191 = vmatpush2.msra.mxu0 0.0
    %1192 = vmatprep.subr.mxu0 0.0
    %1193 = vmatpush2.msra.mxu0 0.0
    %1194 = vmatprep.subr.mxu0 0.0
    %1195 = vmatpush2.msra.mxu0 0.0
    %1196 = vmatprep.mubr.f32.mxu0 0.0
    %1197 = vmatmul.mubr.f32.gmra.mxu0 %v1130
    %v1198 = vpop.f32.mrf.mxu0
    %v1199 = vadd.f32 %v1127, %v1198
    %v1200 = vpop.f32.mrf.mxu0
    %1201 = vdwg.mxu0
    %v1202 = vadd.f32 %v1121, %v1199
    %v1203 = vmax.f32 %v1202, 0.0
    %v1204 = vld [vmem:[#allocation2 + $0xb0] sm:$0xff]
    %v1205 = vld [vmem:[#allocation2 + $0xb8] sm:$0xff]
    %v1206 = vld [vmem:[#allocation2 + $0xc0] sm:$0x1]
    %vm1207 = vcmask 130048
    %v1209 = vsel %vm1207, %v1203, 0
    %1211 = vmatprep.subr.mxu0 0.0
    %1212 = vmatpush1.msra.mxu0 0.0
    %1213 = vmatprep.subr.mxu0 0.0
    %1214 = vmatpush1.msra.mxu0 0.0
    %1215 = vmatprep.subr.mxu0 0.0
    %1216 = vmatpush1.msra.mxu0 0.0
    %1217 = vmatprep.subr.mxu0 0.0
    %1218 = vmatpush1.msra.mxu0 0.0
    %1219 = vmatprep.subr.mxu0 0.0
    %1220 = vmatpush1.msra.mxu0 0.0
    %1221 = vmatprep.subr.mxu0 0.0
    %1222 = vmatpush1.msra.mxu0 0.0
    %1223 = vmatprep.subr.mxu0 0.0
    %1224 = vmatpush1.msra.mxu0 0.0
    %1225 = vmatprep.subr.mxu0 0.0
    %1226 = vmatpush1.msra.mxu0 0.0
    %1227 = vmatprep.subr.mxu0 0.0
    %1228 = vmatpush1.msra.mxu0 0.0
    %1229 = vmatprep.subr.mxu0 0.0
    %1230 = vmatpush1.msra.mxu0 0.0
    %1231 = vmatprep.subr.mxu0 0.0
    %1232 = vmatpush1.msra.mxu0 0.0
    %1233 = vmatprep.subr.mxu0 0.0
    %1234 = vmatpush1.msra.mxu0 0.0
    %1235 = vmatprep.subr.mxu0 0.0
    %1236 = vmatpush1.msra.mxu0 0.0
    %1237 = vmatprep.subr.mxu0 0.0
    %1238 = vmatpush1.msra.mxu0 0.0
    %1239 = vmatprep.subr.mxu0 0.0
    %1240 = vmatpush1.msra.mxu0 %v1205
    %1241 = vmatprep.subr.mxu0 0.0
    %1242 = vmatpush1.msra.mxu0 %v1204
    %1243 = vmatprep.subr.mxu0 0.0
    %1244 = vmatpush2.msra.mxu0 0.0
    %1245 = vmatprep.subr.mxu0 0.0
    %1246 = vmatpush2.msra.mxu0 0.0
    %1247 = vmatprep.subr.mxu0 0.0
    %1248 = vmatpush2.msra.mxu0 0.0
    %1249 = vmatprep.subr.mxu0 0.0
    %1250 = vmatpush2.msra.mxu0 0.0
    %1251 = vmatprep.subr.mxu0 0.0
    %1252 = vmatpush2.msra.mxu0 0.0
    %1253 = vmatprep.subr.mxu0 0.0
    %1254 = vmatpush2.msra.mxu0 0.0
    %1255 = vmatprep.subr.mxu0 0.0
    %1256 = vmatpush2.msra.mxu0 0.0
    %1257 = vmatprep.subr.mxu0 0.0
    %1258 = vmatpush2.msra.mxu0 0.0
    %1259 = vmatprep.subr.mxu0 0.0
    %1260 = vmatpush2.msra.mxu0 0.0
    %1261 = vmatprep.subr.mxu0 0.0
    %1262 = vmatpush2.msra.mxu0 0.0
    %1263 = vmatprep.subr.mxu0 0.0
    %1264 = vmatpush2.msra.mxu0 0.0
    %1265 = vmatprep.subr.mxu0 0.0
    %1266 = vmatpush2.msra.mxu0 0.0
    %1267 = vmatprep.subr.mxu0 0.0
    %1268 = vmatpush2.msra.mxu0 0.0
    %1269 = vmatprep.subr.mxu0 0.0
    %1270 = vmatpush2.msra.mxu0 0.0
    %1271 = vmatprep.subr.mxu0 0.0
    %1272 = vmatpush2.msra.mxu0 0.0
    %1273 = vmatprep.subr.mxu0 0.0
    %1274 = vmatpush2.msra.mxu0 0.0
    %1275 = vmatprep.mubr.f32.mxu0 0.0
    %1276 = vmatmul.mubr.f32.gmra.mxu0 %v1209
    %v1277 = vpop.f32.mrf.mxu0
    %v1278 = vadd.f32 %v1206, %v1277
    %v1279 = vpop.f32.mrf.mxu0
    %1280 = vdwg.mxu0
    %1281 = vrot.lane.b32.xlu0 %v1203, 112
    %v1282 = vpop.permute.xlu0 %1281
    %v1283 = vsel %vm1207, %v1282, 0
    %1285 = vmatprep.subr.mxu0 0.0
    %1286 = vmatpush1.msra.mxu0 0.0
    %1287 = vmatprep.subr.mxu0 0.0
    %1288 = vmatpush1.msra.mxu0 0.0
    %1289 = vmatprep.subr.mxu0 0.0
    %1290 = vmatpush1.msra.mxu0 0.0
    %1291 = vmatprep.subr.mxu0 0.0
    %1292 = vmatpush1.msra.mxu0 0.0
    %1293 = vmatprep.subr.mxu0 0.0
    %1294 = vmatpush1.msra.mxu0 0.0
    %1295 = vmatprep.subr.mxu0 0.0
    %1296 = vmatpush1.msra.mxu0 0.0
    %1297 = vmatprep.subr.mxu0 0.0
    %1298 = vmatpush1.msra.mxu0 0.0
    %1299 = vmatprep.subr.mxu0 0.0
    %1300 = vmatpush1.msra.mxu0 0.0
    %1301 = vmatprep.subr.mxu0 0.0
    %1302 = vmatpush1.msra.mxu0 0.0
    %1303 = vmatprep.subr.mxu0 0.0
    %1304 = vmatpush1.msra.mxu0 0.0
    %1305 = vmatprep.subr.mxu0 0.0
    %1306 = vmatpush1.msra.mxu0 0.0
    %1307 = vmatprep.subr.mxu0 0.0
    %1308 = vmatpush1.msra.mxu0 0.0
    %1309 = vmatprep.subr.mxu0 0.0
    %1310 = vmatpush1.msra.mxu0 0.0
    %1311 = vmatprep.subr.mxu0 0.0
    %1312 = vmatpush1.msra.mxu0 0.0
    %1313 = vmatprep.subr.mxu0 0.0
    %1314 = vmatpush1.msra.mxu0 %v1205
    %1315 = vmatprep.subr.mxu0 0.0
    %1316 = vmatpush1.msra.mxu0 %v1204
    %1317 = vmatprep.subr.mxu0 0.0
    %1318 = vmatpush2.msra.mxu0 0.0
    %1319 = vmatprep.subr.mxu0 0.0
    %1320 = vmatpush2.msra.mxu0 0.0
    %1321 = vmatprep.subr.mxu0 0.0
    %1322 = vmatpush2.msra.mxu0 0.0
    %1323 = vmatprep.subr.mxu0 0.0
    %1324 = vmatpush2.msra.mxu0 0.0
    %1325 = vmatprep.subr.mxu0 0.0
    %1326 = vmatpush2.msra.mxu0 0.0
    %1327 = vmatprep.subr.mxu0 0.0
    %1328 = vmatpush2.msra.mxu0 0.0
    %1329 = vmatprep.subr.mxu0 0.0
    %1330 = vmatpush2.msra.mxu0 0.0
    %1331 = vmatprep.subr.mxu0 0.0
    %1332 = vmatpush2.msra.mxu0 0.0
    %1333 = vmatprep.subr.mxu0 0.0
    %1334 = vmatpush2.msra.mxu0 0.0
    %1335 = vmatprep.subr.mxu0 0.0
    %1336 = vmatpush2.msra.mxu0 0.0
    %1337 = vmatprep.subr.mxu0 0.0
    %1338 = vmatpush2.msra.mxu0 0.0
    %1339 = vmatprep.subr.mxu0 0.0
    %1340 = vmatpush2.msra.mxu0 0.0
    %1341 = vmatprep.subr.mxu0 0.0
    %1342 = vmatpush2.msra.mxu0 0.0
    %1343 = vmatprep.subr.mxu0 0.0
    %1344 = vmatpush2.msra.mxu0 0.0
    %1345 = vmatprep.subr.mxu0 0.0
    %1346 = vmatpush2.msra.mxu0 0.0
    %1347 = vmatprep.subr.mxu0 0.0
    %1348 = vmatpush2.msra.mxu0 0.0
    %1349 = vmatprep.mubr.f32.mxu0 0.0
    %1350 = vmatmul.mubr.f32.gmra.mxu0 %v1283
    %v1351 = vpop.f32.mrf.mxu0
    %v1352 = vadd.f32 %v1206, %v1351
    %v1353 = vpop.f32.mrf.mxu0
    %1354 = vdwg.mxu0
    %v1356 = vrot.slane %v1352, 7
    %v1358 = vsel %vm965, %v1278, %v1356
    %vm1359 = vcmask 17408
    %1360 = vst.msk [vmem:[#allocation5] sm:$0x3] %vm1359, %v1358
    // Predicated region
    $region14: #{forward.1} parent=1 // pred_check
      _
    $region15: #{forward.1} parent=1 // pred_check_branch
      %1362 = sbr.rel (0) target = $region17
    $region16: #{forward.1} parent=1 // pred_region
      %s1364 = ssub.s32 32, 32
      %1365 = vsyncadd [#allocation4], %s1364
      %s1367 = sshll.u32 [#allocation5], 4
      %s1368 = int_to_ptr.vmem [resolvable:$true] %s1367
      %1370 = dma.vmem_to_hbm [thread:$0]  %s1368, 32, %s2, [#allocation4]
    $region17: #{forward.1} parent=1 // pred_fallthru
      _
    // Predicated region
    $region18: #{forward.1} parent=1 // pred_check
      _
    $region19: #{forward.1} parent=1 // pred_check_branch
      %1372 = sbr.rel (0) target = $region21
    $region20: #{forward.1} parent=1 // pred_region
      %1373 = dma.done [#allocation4], 32
    $region21: #{forward.1} parent=1 // pred_fallthru
      _
    %1374 = vsyncpa [#allocation3], 1
    %1375 = vsyncpa [#allocation4], 1

</llo_original>
